<compile_context>
chip_gen: v7x
topology: tpu7x:2x2x1
jax: 0.10.0
libtpu: 0.0.40
codegen_flags: <defaults>
</compile_context>

<pallas_src>
import functools
import math

import jax
import jax.numpy as jnp
from jax import lax
from jax.experimental import pallas as pl
from jax.experimental.pallas import tpu as pltpu


# ---------------------------------------------------------------------------
# small helpers
# ---------------------------------------------------------------------------

def _round_up(v, m):
    return ((v + m - 1) // m) * m


def _pair(v):
    return (v, v) if isinstance(v, int) else tuple(v)


def _pick_tile(total, cap, quantum=8):
    """Largest divisor of `total` that is a multiple of `quantum` and <= `cap`;
    falls back to `total` itself (a full-extent block dim is always legal)."""
    if total <= cap:
        return total
    t = (cap // quantum) * quantum
    while t >= quantum:
        if total % t == 0:
            return t
        t -= quantum
    return total


def _vmem_limit_bytes():
    # Generation-aware scoped-VMEM limit (v7x: 64 MiB physical, v5e/v6e: 128 MiB).
    try:
        cap = int(pltpu.get_tpu_info().vmem_capacity_bytes)
    except Exception:
        cap = 64 * 1024 * 1024
    return int(cap * 0.8)


# ---------------------------------------------------------------------------
# Pallas kernels
# ---------------------------------------------------------------------------

def _conv_stats_kernel(mask_ref, x_ref, w_ref, conv_ref, s_ref, sq_ref, *, taps, ltot):
    """One (group, batch) grid step: the whole wide-flat conv output for this (n, g),
    fused with the per-channel sum / sum-of-squares needed for BatchNorm batch stats.

    mask_ref: (1, Ltot)            f32   1.0 on real output pixels, 0.0 on junk columns
    x_ref:    (1, P, 1, Cg, Linp)  bf16  flattened phase images (resident per (n, g))
    w_ref:    (1, T, Og8, Cg)      bf16  per-tap weight matrices (resident per g)
    conv_ref: (1, Og8, Ltot)       bf16  wide conv output
    s_ref:    (1, Og8, 1)          f32   per-channel sum over this (n, g)'s real pixels
    sq_ref:   (1, Og8, 1)          f32   per-channel sum of squares
    """
    phase = {}
    acc = None
    for t, (pidx, shift) in enumerate(taps):          # static unroll over kh*kw taps
        if pidx not in phase:
            phase[pidx] = x_ref[0, pidx, 0]           # (Cg, Linp) bf16, loaded once
        slab = phase[pidx][:, shift:shift + ltot]     # (Cg, Ltot) contiguous window
        d = jnp.dot(w_ref[0, t], slab, preferred_element_type=jnp.float32)
        acc = d if acc is None else acc + d           # (Og8, Ltot) f32 accumulation
    conv_ref[0] = acc.astype(conv_ref.dtype)
    masked = acc * mask_ref[...]                      # junk wide columns -> 0
    s_ref[0] = jnp.sum(masked, axis=1, keepdims=True)
    sq_ref[0] = jnp.sum(masked * acc, axis=1, keepdims=True)


def _bn_relu_kernel(x_ref, scale_ref, shift_ref, o_ref, *, ow):
    """BatchNorm (precomputed scale/shift) + ReLU; also drops the junk columns of the
    wide conv rows so the store is directly the compact NCHW output."""
    x = x_ref[0].astype(jnp.float32)                        # (tc, t_r, Wph)
    y = x[:, :, :ow] * scale_ref[...] + shift_ref[...]      # (tc, t_r, OW)
    o_ref[0] = jnp.maximum(y, 0.0)


# ---------------------------------------------------------------------------
# XLA-side preprocessing (all ~1x input traffic, no kh*kw duplication)
# ---------------------------------------------------------------------------

def _build_phase_input(x, ksize, stride, padding, dilation, groups):
    """Pad, phase-decompose (one phase per stride residue) and row-flatten the input
    so that every conv tap becomes a constant flat shift into a phase image.

    Returns
      xph:  (N, P, G, Cg, Linp) bf16
      taps: tuple of (phase_index, flat_shift) per kernel tap, in (i, j) order
      geom: dict(OH, OW, Wph, Ltot, Linp, P)
    """
    N, C, H, W = x.shape
    kh, kw = ksize
    sh, sw = stride
    ph, pw = padding
    dh, dw = dilation
    G = groups
    Cg = C // G

    Hp, Wp = H + 2 * ph, W + 2 * pw
    OH = (Hp - dh * (kh - 1) - 1) // sh + 1
    OW = (Wp - dw * (kw - 1) - 1) // sw + 1
    a_max = (dh * (kh - 1)) // sh
    b_max = (dw * (kw - 1)) // sw
    Wph = OW + b_max                        # "wide" output row width
    Hph = OH + a_max                        # phase-image rows that are actually read
    Ltot = OH * Wph                         # wide-flat output length
    Linp = _round_up(Ltot + a_max * Wph + b_max, 128)
    P = sh * sw

    xp = jnp.pad(x, ((0, 0), (0, 0), (ph, ph), (pw, pw))).astype(jnp.bfloat16)
    phases = []
    for p in range(sh):
        for q in range(sw):
            sub = xp[:, :, p::sh, q::sw][:, :, :Hph, :Wph]
            pad_h = Hph - sub.shape[2]
            pad_w = Wph - sub.shape[3]
            if pad_h or pad_w:
                sub = jnp.pad(sub, ((0, 0), (0, 0), (0, pad_h), (0, pad_w)))
            phases.append(sub)
    xph = jnp.stack(phases, axis=1)                          # (N, P, C, Hph, Wph)
    xph = xph.reshape(N, P, G, Cg, Hph * Wph)
    if Linp > Hph * Wph:
        xph = jnp.pad(xph, ((0, 0),) * 4 + ((0, Linp - Hph * Wph),))

    taps = []
    for i in range(kh):
        for j in range(kw):
            pi, ai = (i * dh) % sh, (i * dh) // sh
            qj, bj = (j * dw) % sw, (j * dw) // sw
            taps.append((pi * sw + qj, ai * Wph + bj))

    geom = dict(OH=OH, OW=OW, Wph=Wph, Ltot=Ltot, Linp=Linp, P=P)
    return xph, tuple(taps), geom


def _build_weights(weight, groups, Og8):
    O, Cg, kh, kw = weight.shape
    G, Og, T = groups, O // groups, kh * kw
    w = weight.reshape(G, Og, Cg, T).transpose(0, 3, 1, 2)   # (G, T, Og, Cg)
    if Og8 > Og:
        w = jnp.pad(w, ((0, 0), (0, 0), (0, Og8 - Og), (0, 0)))
    return w.astype(jnp.bfloat16)


# ---------------------------------------------------------------------------
# forward
# ---------------------------------------------------------------------------

def bn_conv2d_forward(x, weight, gamma, beta, *, stride, padding, dilation=1,
                      groups=1, eps=1e-5):
    """Conv2d(bias=False) + BatchNorm2d (training-mode batch statistics) + ReLU.

    x:          (N, C, H, W)            float32
    weight:     (O, C//groups, kH, kW)  float32
    gamma/beta: (O,)                    float32
    returns     (N, O, OH, OW)          float32
    """
    x = x.astype(jnp.float32)
    weight = weight.astype(jnp.float32)
    gamma = gamma.astype(jnp.float32)
    beta = beta.astype(jnp.float32)

    N, C, H, W = x.shape
    O, Cg, kh, kw = weight.shape
    G = groups
    stride, padding, dilation = _pair(stride), _pair(padding), _pair(dilation)
    assert C == Cg * G and O % G == 0
    Og = O // G
    Og8 = _round_up(Og, 8)                  # sublane-aligned channels per group
    C8 = G * Og8
    T = kh * kw

    xph, taps, geom = _build_phase_input(x, (kh, kw), stride, padding, dilation, G)
    OH, OW, Wph, Ltot, Linp, P = (geom[k] for k in ("OH", "OW", "Wph", "Ltot", "Linp", "P"))
    w_arr = _build_weights(weight, G, Og8)

    # 1.0 on real output pixels, 0.0 on the junk columns of the wide rows.
    mask = (jnp.arange(Ltot, dtype=jnp.int32) % Wph < OW).astype(jnp.float32)
    mask = mask.reshape(1, Ltot)

    vmem_limit = _vmem_limit_bytes()

    # ---- fused conv + per-channel sums (one grid step per (group, batch)) ----
    conv, ssum, ssq = pl.pallas_call(
        functools.partial(_conv_stats_kernel, taps=taps, ltot=Ltot),
        out_shape=(
            jax.ShapeDtypeStruct((N, C8, Ltot), jnp.bfloat16),
            jax.ShapeDtypeStruct((N, C8, 1), jnp.float32),
            jax.ShapeDtypeStruct((N, C8, 1), jnp.float32),
        ),
        grid=(G, N),
        in_specs=[
            pl.BlockSpec((1, Ltot), lambda g, n: (0, 0)),
            pl.BlockSpec((1, P, 1, Cg, Linp), lambda g, n: (n, 0, g, 0, 0)),
            pl.BlockSpec((1, T, Og8, Cg), lambda g, n: (g, 0, 0, 0)),
        ],
        out_specs=(
            pl.BlockSpec((1, Og8, Ltot), lambda g, n: (n, g, 0)),
            pl.BlockSpec((1, Og8, 1), lambda g, n: (n, g, 0)),
            pl.BlockSpec((1, Og8, 1), lambda g, n: (n, g, 0)),
        ),
        compiler_params=pltpu.CompilerParams(
            dimension_semantics=("parallel", "parallel"),
            vmem_limit_bytes=vmem_limit),
    )(mask, xph, w_arr)

    # ---- BatchNorm batch statistics (tiny, plain JAX) ------------------------
    M = N * OH * OW
    mean = jnp.sum(ssum, axis=0) / M                         # (C8, 1)
    # E[x^2] - E[x]^2 can go slightly negative from rounding; clamp at 0.
    var = jnp.maximum(jnp.sum(ssq, axis=0) / M - mean * mean, 0.0)

    def _pad_ch(v):                                          # (O,) -> (C8, 1, 1)
        v = v.reshape(G, Og)
        if Og8 > Og:
            v = jnp.pad(v, ((0, 0), (0, Og8 - Og)))
        return v.reshape(C8, 1, 1)

    inv_std = lax.rsqrt(var + eps).reshape(C8, 1, 1)
    scale = _pad_ch(gamma) * inv_std
    shift = _pad_ch(beta) - mean.reshape(C8, 1, 1) * scale

    # ---- BN + ReLU: read wide bf16 rows, write compact NCHW f32 --------------
    conv4 = conv.reshape(N, C8, OH, Wph)                     # free: Ltot == OH * Wph
    t_r = _pick_tile(OH, 128)
    cap_c = max(8, (8 * 1024 * 1024) // max(1, t_r * Wph * 12))
    tc = _pick_tile(C8, min(cap_c, 512))

    y = pl.pallas_call(
        functools.partial(_bn_relu_kernel, ow=OW),
        out_shape=jax.ShapeDtypeStruct((N, C8, OH, OW), jnp.float32),
        grid=(N, C8 // tc, OH // t_r),
        in_specs=[
            pl.BlockSpec((1, tc, t_r, Wph), lambda n, c, r: (n, c, r, 0)),
            pl.BlockSpec((tc, 1, 1), lambda n, c, r: (c, 0, 0)),
            pl.BlockSpec((tc, 1, 1), lambda n, c, r: (c, 0, 0)),
        ],
        out_specs=pl.BlockSpec((1, tc, t_r, OW), lambda n, c, r: (n, c, r, 0)),
        compiler_params=pltpu.CompilerParams(
            dimension_semantics=("parallel", "parallel", "parallel"),
            vmem_limit_bytes=vmem_limit),
    )(conv4, scale, shift)

    # ---- final layout: only a channel slice when Og is not a multiple of 8 ---
    if Og8 != Og:
        y = y.reshape(N, G, Og8, OH, OW)[:, :, :Og]
    return y.reshape(N, O, OH, OW)


# ---------------------------------------------------------------------------
# reference (plain JAX) for verification
# ---------------------------------------------------------------------------

def _reference(x, weight, gamma, beta, *, stride, padding, dilation, groups, eps=1e-5):
    stride, padding, dilation = _pair(stride), _pair(padding), _pair(dilation)
    conv = lax.conv_general_dilated(
        x, weight, window_strides=stride,
        padding=[(padding[0], padding[0]), (padding[1], padding[1])],
        rhs_dilation=dilation, feature_group_count=groups,
        dimension_numbers=("NCHW", "OIHW", "NCHW"))
    mean = jnp.mean(conv, axis=(0, 2, 3), keepdims=True)
    var = jnp.mean((conv - mean) ** 2, axis=(0, 2, 3), keepdims=True)
    y = (conv - mean) / jnp.sqrt(var + eps)
    y = y * gamma.reshape(1, -1, 1, 1) + beta.reshape(1, -1, 1, 1)
    return jnp.maximum(y, 0.0)


def _run_case(key, *, N, C, H, W, O, k, stride, padding, dilation, groups):
    kx, kw_key, kg, kb = jax.random.split(key, 4)
    x = jax.random.normal(kx, (N, C, H, W), dtype=jnp.float32)
    fan_in = (C // groups) * k * k
    bound = 1.0 / math.sqrt(fan_in)
    weight = jax.random.uniform(kw_key, (O, C // groups, k, k),
                                minval=-bound, maxval=bound, dtype=jnp.float32)
    gamma = 1.0 + 0.1 * jax.random.normal(kg, (O,), dtype=jnp.float32)
    beta = 0.1 * jax.random.normal(kb, (O,), dtype=jnp.float32)

    fwd = jax.jit(functools.partial(bn_conv2d_forward, stride=stride,
                                    padding=padding, dilation=dilation,
                                    groups=groups))
    out = jax.block_until_ready(fwd(x, weight, gamma, beta))

    ref = _reference(x, weight, gamma, beta, stride=stride, padding=padding,
                     dilation=dilation, groups=groups)
    assert out.shape == ref.shape, (out.shape, ref.shape)
    # bf16 MXU operands -> looser tolerance than a pure-f32 conv
    max_err = float(jnp.max(jnp.abs(out - ref)))
    assert jnp.allclose(out, ref, rtol=2e-2, atol=2e-2), max_err


if __name__ == "__main__":
    key = jax.random.PRNGKey(0)
    k1, k2, k3 = jax.random.split(key, 3)

    # BN_Conv2d(in_channels=4, out_channels=8, kernel_size=3, stride=1, padding=1)
    _run_case(k1, N=2, C=4, H=16, W=16, O=8, k=3, stride=1, padding=1,
              dilation=1, groups=1)
    # strided + grouped variant
    _run_case(k2, N=2, C=4, H=12, W=12, O=8, k=3, stride=2, padding=1,
              dilation=1, groups=2)
    # dilated variant
    _run_case(k3, N=1, C=3, H=15, W=15, O=16, k=3, stride=1, padding=2,
              dilation=2, groups=1)

    print("KERNEL_OK")
</pallas_src>

<mosaic_0001>
module attributes {stable_mosaic.version = 11 : i64} {
  func.func @_conv_stats_kernel(%arg0: i32, %arg1: i32, %arg2: memref<1x288xf32, #tpu.memory_space<vmem>>, %arg3: memref<1x1x1x4x384xbf16, #tpu.memory_space<vmem>>, %arg4: memref<1x9x8x4xbf16, #tpu.memory_space<vmem>>, %arg5: memref<1x8x288xbf16, #tpu.memory_space<vmem>>, %arg6: memref<1x8x1xf32, #tpu.memory_space<vmem>>, %arg7: memref<1x8x1xf32, #tpu.memory_space<vmem>>) attributes {dimension_semantics = [#tpu.dimension_semantics<parallel>, #tpu.dimension_semantics<parallel>], iteration_bounds = array<i64: 1, 2>, scalar_prefetch = 0 : i64, scratch_operands = 0 : i64, tpu.core_type = #tpu.core_type<tc>, window_params = [{pipeline_mode = #tpu.pipeline_mode<synchronous>, transform_indices = @transform_0, window_bounds = array<i64: 1, 288>}, {transform_indices = @transform_1, window_bounds = array<i64: 1, 1, 1, 4, 384>}, {transform_indices = @transform_2, window_bounds = array<i64: 1, 9, 8, 4>}, {transform_indices = @transform_3, window_bounds = array<i64: 1, 8, 288>}, {transform_indices = @transform_4, window_bounds = array<i64: 1, 8, 1>}, {transform_indices = @transform_5, window_bounds = array<i64: 1, 8, 1>}]} {
    %c0 = arith.constant 0 : index
    %c0_0 = arith.constant 0 : index
    %c0_1 = arith.constant 0 : index
    %c0_2 = arith.constant 0 : index
    %c0_3 = arith.constant 0 : index
    %0 = vector.load %arg3[%c0, %c0_0, %c0_1, %c0_2, %c0_3] : memref<1x1x1x4x384xbf16, #tpu.memory_space<vmem>>, vector<1x1x1x4x384xbf16>
    %1 = vector.shape_cast %0 : vector<1x1x1x4x384xbf16> to vector<4x384xbf16>
    %2 = vector.extract_strided_slice %1 {offsets = [0, 0], sizes = [4, 288], strides = [1, 1]} : vector<4x384xbf16> to vector<4x288xbf16>
    %c0_4 = arith.constant 0 : index
    %c0_5 = arith.constant 0 : index
    %c0_6 = arith.constant 0 : index
    %c0_7 = arith.constant 0 : index
    %3 = vector.load %arg4[%c0_4, %c0_5, %c0_6, %c0_7] : memref<1x9x8x4xbf16, #tpu.memory_space<vmem>>, vector<1x1x8x4xbf16>
    %4 = vector.shape_cast %3 : vector<1x1x8x4xbf16> to vector<8x4xbf16>
    %cst = arith.constant dense<0.000000e+00> : vector<8x288xf32>
    %5 = tpu.matmul %4, %2, %cst {dimension_numbers = #tpu.dot_dimension_numbers<[1], [0], [0], [1], [0, 0, 1, 1], [], []>} : vector<8x4xbf16>, vector<4x288xbf16>, vector<8x288xf32> -> vector<8x288xf32>
    %6 = vector.extract_strided_slice %1 {offsets = [0, 1], sizes = [4, 288], strides = [1, 1]} : vector<4x384xbf16> to vector<4x288xbf16>
    %c0_8 = arith.constant 0 : index
    %c1 = arith.constant 1 : index
    %c0_9 = arith.constant 0 : index
    %c0_10 = arith.constant 0 : index
    %7 = vector.load %arg4[%c0_8, %c1, %c0_9, %c0_10] : memref<1x9x8x4xbf16, #tpu.memory_space<vmem>>, vector<1x1x8x4xbf16>
    %8 = vector.shape_cast %7 : vector<1x1x8x4xbf16> to vector<8x4xbf16>
    %cst_11 = arith.constant dense<0.000000e+00> : vector<8x288xf32>
    %9 = tpu.matmul %8, %6, %cst_11 {dimension_numbers = #tpu.dot_dimension_numbers<[1], [0], [0], [1], [0, 0, 1, 1], [], []>} : vector<8x4xbf16>, vector<4x288xbf16>, vector<8x288xf32> -> vector<8x288xf32>
    %10 = arith.addf %5, %9 : vector<8x288xf32>
    %11 = vector.extract_strided_slice %1 {offsets = [0, 2], sizes = [4, 288], strides = [1, 1]} : vector<4x384xbf16> to vector<4x288xbf16>
    %c0_12 = arith.constant 0 : index
    %c2 = arith.constant 2 : index
    %c0_13 = arith.constant 0 : index
    %c0_14 = arith.constant 0 : index
    %12 = vector.load %arg4[%c0_12, %c2, %c0_13, %c0_14] : memref<1x9x8x4xbf16, #tpu.memory_space<vmem>>, vector<1x1x8x4xbf16>
    %13 = vector.shape_cast %12 : vector<1x1x8x4xbf16> to vector<8x4xbf16>
    %cst_15 = arith.constant dense<0.000000e+00> : vector<8x288xf32>
    %14 = tpu.matmul %13, %11, %cst_15 {dimension_numbers = #tpu.dot_dimension_numbers<[1], [0], [0], [1], [0, 0, 1, 1], [], []>} : vector<8x4xbf16>, vector<4x288xbf16>, vector<8x288xf32> -> vector<8x288xf32>
    %15 = arith.addf %10, %14 : vector<8x288xf32>
    %16 = vector.extract_strided_slice %1 {offsets = [0, 18], sizes = [4, 288], strides = [1, 1]} : vector<4x384xbf16> to vector<4x288xbf16>
    %c0_16 = arith.constant 0 : index
    %c3 = arith.constant 3 : index
    %c0_17 = arith.constant 0 : index
    %c0_18 = arith.constant 0 : index
    %17 = vector.load %arg4[%c0_16, %c3, %c0_17, %c0_18] : memref<1x9x8x4xbf16, #tpu.memory_space<vmem>>, vector<1x1x8x4xbf16>
    %18 = vector.shape_cast %17 : vector<1x1x8x4xbf16> to vector<8x4xbf16>
    %cst_19 = arith.constant dense<0.000000e+00> : vector<8x288xf32>
    %19 = tpu.matmul %18, %16, %cst_19 {dimension_numbers = #tpu.dot_dimension_numbers<[1], [0], [0], [1], [0, 0, 1, 1], [], []>} : vector<8x4xbf16>, vector<4x288xbf16>, vector<8x288xf32> -> vector<8x288xf32>
    %20 = arith.addf %15, %19 : vector<8x288xf32>
    %21 = vector.extract_strided_slice %1 {offsets = [0, 19], sizes = [4, 288], strides = [1, 1]} : vector<4x384xbf16> to vector<4x288xbf16>
    %c0_20 = arith.constant 0 : index
    %c4 = arith.constant 4 : index
    %c0_21 = arith.constant 0 : index
    %c0_22 = arith.constant 0 : index
    %22 = vector.load %arg4[%c0_20, %c4, %c0_21, %c0_22] : memref<1x9x8x4xbf16, #tpu.memory_space<vmem>>, vector<1x1x8x4xbf16>
    %23 = vector.shape_cast %22 : vector<1x1x8x4xbf16> to vector<8x4xbf16>
    %cst_23 = arith.constant dense<0.000000e+00> : vector<8x288xf32>
    %24 = tpu.matmul %23, %21, %cst_23 {dimension_numbers = #tpu.dot_dimension_numbers<[1], [0], [0], [1], [0, 0, 1, 1], [], []>} : vector<8x4xbf16>, vector<4x288xbf16>, vector<8x288xf32> -> vector<8x288xf32>
    %25 = arith.addf %20, %24 : vector<8x288xf32>
    %26 = vector.extract_strided_slice %1 {offsets = [0, 20], sizes = [4, 288], strides = [1, 1]} : vector<4x384xbf16> to vector<4x288xbf16>
    %c0_24 = arith.constant 0 : index
    %c5 = arith.constant 5 : index
    %c0_25 = arith.constant 0 : index
    %c0_26 = arith.constant 0 : index
    %27 = vector.load %arg4[%c0_24, %c5, %c0_25, %c0_26] : memref<1x9x8x4xbf16, #tpu.memory_space<vmem>>, vector<1x1x8x4xbf16>
    %28 = vector.shape_cast %27 : vector<1x1x8x4xbf16> to vector<8x4xbf16>
    %cst_27 = arith.constant dense<0.000000e+00> : vector<8x288xf32>
    %29 = tpu.matmul %28, %26, %cst_27 {dimension_numbers = #tpu.dot_dimension_numbers<[1], [0], [0], [1], [0, 0, 1, 1], [], []>} : vector<8x4xbf16>, vector<4x288xbf16>, vector<8x288xf32> -> vector<8x288xf32>
    %30 = arith.addf %25, %29 : vector<8x288xf32>
    %31 = vector.extract_strided_slice %1 {offsets = [0, 36], sizes = [4, 288], strides = [1, 1]} : vector<4x384xbf16> to vector<4x288xbf16>
    %c0_28 = arith.constant 0 : index
    %c6 = arith.constant 6 : index
    %c0_29 = arith.constant 0 : index
    %c0_30 = arith.constant 0 : index
    %32 = vector.load %arg4[%c0_28, %c6, %c0_29, %c0_30] : memref<1x9x8x4xbf16, #tpu.memory_space<vmem>>, vector<1x1x8x4xbf16>
    %33 = vector.shape_cast %32 : vector<1x1x8x4xbf16> to vector<8x4xbf16>
    %cst_31 = arith.constant dense<0.000000e+00> : vector<8x288xf32>
    %34 = tpu.matmul %33, %31, %cst_31 {dimension_numbers = #tpu.dot_dimension_numbers<[1], [0], [0], [1], [0, 0, 1, 1], [], []>} : vector<8x4xbf16>, vector<4x288xbf16>, vector<8x288xf32> -> vector<8x288xf32>
    %35 = arith.addf %30, %34 : vector<8x288xf32>
    %36 = vector.extract_strided_slice %1 {offsets = [0, 37], sizes = [4, 288], strides = [1, 1]} : vector<4x384xbf16> to vector<4x288xbf16>
    %c0_32 = arith.constant 0 : index
    %c7 = arith.constant 7 : index
    %c0_33 = arith.constant 0 : index
    %c0_34 = arith.constant 0 : index
    %37 = vector.load %arg4[%c0_32, %c7, %c0_33, %c0_34] : memref<1x9x8x4xbf16, #tpu.memory_space<vmem>>, vector<1x1x8x4xbf16>
    %38 = vector.shape_cast %37 : vector<1x1x8x4xbf16> to vector<8x4xbf16>
    %cst_35 = arith.constant dense<0.000000e+00> : vector<8x288xf32>
    %39 = tpu.matmul %38, %36, %cst_35 {dimension_numbers = #tpu.dot_dimension_numbers<[1], [0], [0], [1], [0, 0, 1, 1], [], []>} : vector<8x4xbf16>, vector<4x288xbf16>, vector<8x288xf32> -> vector<8x288xf32>
    %40 = arith.addf %35, %39 : vector<8x288xf32>
    %41 = vector.extract_strided_slice %1 {offsets = [0, 38], sizes = [4, 288], strides = [1, 1]} : vector<4x384xbf16> to vector<4x288xbf16>
    %c0_36 = arith.constant 0 : index
    %c8 = arith.constant 8 : index
    %c0_37 = arith.constant 0 : index
    %c0_38 = arith.constant 0 : index
    %42 = vector.load %arg4[%c0_36, %c8, %c0_37, %c0_38] : memref<1x9x8x4xbf16, #tpu.memory_space<vmem>>, vector<1x1x8x4xbf16>
    %43 = vector.shape_cast %42 : vector<1x1x8x4xbf16> to vector<8x4xbf16>
    %cst_39 = arith.constant dense<0.000000e+00> : vector<8x288xf32>
    %44 = tpu.matmul %43, %41, %cst_39 {dimension_numbers = #tpu.dot_dimension_numbers<[1], [0], [0], [1], [0, 0, 1, 1], [], []>} : vector<8x4xbf16>, vector<4x288xbf16>, vector<8x288xf32> -> vector<8x288xf32>
    %45 = arith.addf %40, %44 : vector<8x288xf32>
    %46 = arith.truncf %45 : vector<8x288xf32> to vector<8x288xbf16>
    %c0_40 = arith.constant 0 : index
    %c0_41 = arith.constant 0 : index
    %c0_42 = arith.constant 0 : index
    %47 = vector.load %arg5[%c0_40, %c0_41, %c0_42] : memref<1x8x288xbf16, #tpu.memory_space<vmem>>, vector<1x8x288xbf16>
    %48 = vector.shape_cast %47 : vector<1x8x288xbf16> to vector<8x288xbf16>
    %49 = vector.shape_cast %46 : vector<8x288xbf16> to vector<1x8x288xbf16>
    tpu.vector_store %arg5[%c0_40, %c0_41, %c0_42], %49 {strides = array<i32>} : memref<1x8x288xbf16, #tpu.memory_space<vmem>>, vector<1x8x288xbf16>,
    %c0_43 = arith.constant 0 : index
    %c0_44 = arith.constant 0 : index
    %50 = vector.load %arg2[%c0_43, %c0_44] : memref<1x288xf32, #tpu.memory_space<vmem>>, vector<1x288xf32>
    %51 = vector.broadcast %50 : vector<1x288xf32> to vector<8x288xf32>
    %52 = arith.mulf %45, %51 : vector<8x288xf32>
    %cst_45 = arith.constant dense<0.000000e+00> : vector<8xf32>
    %53 = vector.multi_reduction <add>, %52, %cst_45 [1] : vector<8x288xf32> to vector<8xf32>
    %54 = vector.shape_cast %53 : vector<8xf32> to vector<8x1xf32>
    %c0_46 = arith.constant 0 : index
    %c0_47 = arith.constant 0 : index
    %c0_48 = arith.constant 0 : index
    %55 = vector.load %arg6[%c0_46, %c0_47, %c0_48] : memref<1x8x1xf32, #tpu.memory_space<vmem>>, vector<1x8x1xf32>
    %56 = vector.shape_cast %55 : vector<1x8x1xf32> to vector<8x1xf32>
    %57 = vector.shape_cast %54 : vector<8x1xf32> to vector<1x8x1xf32>
    tpu.vector_store %arg6[%c0_46, %c0_47, %c0_48], %57 {strides = array<i32>} : memref<1x8x1xf32, #tpu.memory_space<vmem>>, vector<1x8x1xf32>,
    %58 = arith.mulf %52, %45 : vector<8x288xf32>
    %cst_49 = arith.constant dense<0.000000e+00> : vector<8xf32>
    %59 = vector.multi_reduction <add>, %58, %cst_49 [1] : vector<8x288xf32> to vector<8xf32>
    %60 = vector.shape_cast %59 : vector<8xf32> to vector<8x1xf32>
    %c0_50 = arith.constant 0 : index
    %c0_51 = arith.constant 0 : index
    %c0_52 = arith.constant 0 : index
    %61 = vector.load %arg7[%c0_50, %c0_51, %c0_52] : memref<1x8x1xf32, #tpu.memory_space<vmem>>, vector<1x8x1xf32>
    %62 = vector.shape_cast %61 : vector<1x8x1xf32> to vector<8x1xf32>
    %63 = vector.shape_cast %60 : vector<8x1xf32> to vector<1x8x1xf32>
    tpu.vector_store %arg7[%c0_50, %c0_51, %c0_52], %63 {strides = array<i32>} : memref<1x8x1xf32, #tpu.memory_space<vmem>>, vector<1x8x1xf32>,
    return
  }
  func.func @transform_0(%arg0: i32, %arg1: i32) -> (i32, i32) {
    %c0_i32 = arith.constant 0 : i32
    %c0_i32_0 = arith.constant 0 : i32
    %c0_i32_1 = arith.constant 0 : i32
    return %c0_i32, %c0_i32_0 : i32, i32
  }
  func.func @transform_1(%arg0: i32, %arg1: i32) -> (i32, i32, i32, i32, i32) {
    %c0_i32 = arith.constant 0 : i32
    %c0_i32_0 = arith.constant 0 : i32
    %c0_i32_1 = arith.constant 0 : i32
    %c0_i32_2 = arith.constant 0 : i32
    return %arg1, %c0_i32, %arg0, %c0_i32_0, %c0_i32_1 : i32, i32, i32, i32, i32
  }
  func.func @transform_2(%arg0: i32, %arg1: i32) -> (i32, i32, i32, i32) {
    %c0_i32 = arith.constant 0 : i32
    %c0_i32_0 = arith.constant 0 : i32
    %c0_i32_1 = arith.constant 0 : i32
    %c0_i32_2 = arith.constant 0 : i32
    return %arg0, %c0_i32, %c0_i32_0, %c0_i32_1 : i32, i32, i32, i32
  }
  func.func @transform_3(%arg0: i32, %arg1: i32) -> (i32, i32, i32) {
    %c0_i32 = arith.constant 0 : i32
    %c0_i32_0 = arith.constant 0 : i32
    return %arg1, %arg0, %c0_i32 : i32, i32, i32
  }
  func.func @transform_4(%arg0: i32, %arg1: i32) -> (i32, i32, i32) {
    %c0_i32 = arith.constant 0 : i32
    %c0_i32_0 = arith.constant 0 : i32
    return %arg1, %arg0, %c0_i32 : i32, i32, i32
  }
  func.func @transform_5(%arg0: i32, %arg1: i32) -> (i32, i32, i32) {
    %c0_i32 = arith.constant 0 : i32
    %c0_i32_0 = arith.constant 0 : i32
    return %arg1, %arg0, %c0_i32 : i32, i32, i32
  }
}

module attributes {stable_mosaic.version = 11 : i64} {
  func.func @_bn_relu_kernel(%arg0: i32, %arg1: i32, %arg2: i32, %arg3: memref<1x8x16x18xbf16, #tpu.memory_space<vmem>>, %arg4: memref<8x1x1xf32, #tpu.memory_space<vmem>>, %arg5: memref<8x1x1xf32, #tpu.memory_space<vmem>>, %arg6: memref<1x8x16x16xf32, #tpu.memory_space<vmem>>) attributes {dimension_semantics = [#tpu.dimension_semantics<parallel>, #tpu.dimension_semantics<parallel>, #tpu.dimension_semantics<parallel>], iteration_bounds = array<i64: 2, 1, 1>, scalar_prefetch = 0 : i64, scratch_operands = 0 : i64, tpu.core_type = #tpu.core_type<tc>, window_params = [{transform_indices = @transform_0, window_bounds = array<i64: 1, 8, 16, 18>}, {transform_indices = @transform_1, window_bounds = array<i64: 8, 1, 1>}, {transform_indices = @transform_2, window_bounds = array<i64: 8, 1, 1>}, {transform_indices = @transform_3, window_bounds = array<i64: 1, 8, 16, 16>}]} {
    %c0 = arith.constant 0 : index
    %c0_0 = arith.constant 0 : index
    %c0_1 = arith.constant 0 : index
    %c0_2 = arith.constant 0 : index
    %0 = vector.load %arg3[%c0, %c0_0, %c0_1, %c0_2] : memref<1x8x16x18xbf16, #tpu.memory_space<vmem>>, vector<1x8x16x18xbf16>
    %1 = vector.shape_cast %0 : vector<1x8x16x18xbf16> to vector<8x16x18xbf16>
    %2 = arith.extf %1 : vector<8x16x18xbf16> to vector<8x16x18xf32>
    %3 = vector.extract_strided_slice %2 {offsets = [0, 0, 0], sizes = [8, 16, 16], strides = [1, 1, 1]} : vector<8x16x18xf32> to vector<8x16x16xf32>
    %c0_3 = arith.constant 0 : index
    %c0_4 = arith.constant 0 : index
    %c0_5 = arith.constant 0 : index
    %4 = vector.load %arg4[%c0_3, %c0_4, %c0_5] : memref<8x1x1xf32, #tpu.memory_space<vmem>>, vector<8x1x1xf32>
    %5 = vector.broadcast %4 : vector<8x1x1xf32> to vector<8x16x16xf32>
    %6 = arith.mulf %3, %5 : vector<8x16x16xf32>
    %c0_6 = arith.constant 0 : index
    %c0_7 = arith.constant 0 : index
    %c0_8 = arith.constant 0 : index
    %7 = vector.load %arg5[%c0_6, %c0_7, %c0_8] : memref<8x1x1xf32, #tpu.memory_space<vmem>>, vector<8x1x1xf32>
    %8 = vector.broadcast %7 : vector<8x1x1xf32> to vector<8x16x16xf32>
    %9 = arith.addf %6, %8 : vector<8x16x16xf32>
    %cst = arith.constant 0.000000e+00 : f32
    %10 = vector.broadcast %cst : f32 to vector<8x16x16xf32>
    %11 = arith.maximumf %9, %10 : vector<8x16x16xf32>
    %c0_9 = arith.constant 0 : index
    %c0_10 = arith.constant 0 : index
    %c0_11 = arith.constant 0 : index
    %c0_12 = arith.constant 0 : index
    %12 = vector.load %arg6[%c0_9, %c0_10, %c0_11, %c0_12] : memref<1x8x16x16xf32, #tpu.memory_space<vmem>>, vector<1x8x16x16xf32>
    %13 = vector.shape_cast %12 : vector<1x8x16x16xf32> to vector<8x16x16xf32>
    %14 = vector.shape_cast %11 : vector<8x16x16xf32> to vector<1x8x16x16xf32>
    tpu.vector_store %arg6[%c0_9, %c0_10, %c0_11, %c0_12], %14 {strides = array<i32>} : memref<1x8x16x16xf32, #tpu.memory_space<vmem>>, vector<1x8x16x16xf32>,
    return
  }
  func.func @transform_0(%arg0: i32, %arg1: i32, %arg2: i32) -> (i32, i32, i32, i32) {
    %c0_i32 = arith.constant 0 : i32
    %c0_i32_0 = arith.constant 0 : i32
    return %arg0, %arg1, %arg2, %c0_i32 : i32, i32, i32, i32
  }
  func.func @transform_1(%arg0: i32, %arg1: i32, %arg2: i32) -> (i32, i32, i32) {
    %c0_i32 = arith.constant 0 : i32
    %c0_i32_0 = arith.constant 0 : i32
    %c0_i32_1 = arith.constant 0 : i32
    return %arg1, %c0_i32, %c0_i32_0 : i32, i32, i32
  }
  func.func @transform_2(%arg0: i32, %arg1: i32, %arg2: i32) -> (i32, i32, i32) {
    %c0_i32 = arith.constant 0 : i32
    %c0_i32_0 = arith.constant 0 : i32
    %c0_i32_1 = arith.constant 0 : i32
    return %arg1, %c0_i32, %c0_i32_0 : i32, i32, i32
  }
  func.func @transform_3(%arg0: i32, %arg1: i32, %arg2: i32) -> (i32, i32, i32, i32) {
    %c0_i32 = arith.constant 0 : i32
    %c0_i32_0 = arith.constant 0 : i32
    return %arg0, %arg1, %arg2, %c0_i32 : i32, i32, i32, i32
  }
}

</mosaic_0001>

<llo_original>
// kernel: bn_conv2d_forward.3
$region0: #{bn_conv2d_forward.3}
  #allocation0 [shape = 'u32[]', space=smem, size = 0x4, offset = 0x4, fixed_abs, tag = 'smem constant byte address 0x4 - core index']
  #allocation1 [shape = 'u32[144,128]{1,0:T(1,128)}', space=vmem, size = 0x12000, scoped, tag = 'internal scratch']
  %s0 = inlined_call_operand.vmem [shape: bf16[2,8,16,18], index: 0, kind: input, shape index: {}]
  %s1 = inlined_call_operand.vmem [shape: f32[8,1,1], index: 1, kind: input, shape index: {}]
  %s2 = inlined_call_operand.vmem [shape: f32[8,1,1], index: 2, kind: input, shape index: {}]
  %s3 = inlined_call_operand.hbm [shape: f32[2,8,16,16], index: 3, kind: output, shape index: {}]
  %s4 = sld [smem:[#allocation0]]
  $region45: #{bn_conv2d_forward.3} parent=0
    _
  %s6 = ssub.s32 1, %s4
  %s7 = scalar_select 0, %s6, %s4
  $region1: #{bn_conv2d_forward.3} parent=0
    #allocation2 [shape = 'u8[131072]{0}', space=vmem, size = 0x20000, scoped, tag = 'output window, operand 0']
    #allocation3 [shape = 's32[2]{0}', space=sflag, size = 0x8, scoped, tag = 'scoped memory for bn_conv2d_forward.3']
    %8 = vsyncpa [#allocation3], 0
    %s9 = scalar_lea.sflag [#allocation3], 1
    %10 = vsyncpa %s9, 0
    loop: start=0, step=1, limit=4
    $region2: #{bn_conv2d_forward.3} parent=1 // loop_pre_header
      _
    $region3: #{bn_conv2d_forward.3} parent=1 // loop_header
      %s12 = sphi 0, %s16
      %p13 = scmp.ge.s32.totalorder %s12, 4
      %s19 = sphi 0, %s38
      %s20 = sphi 0, %s34
      %s21 = sphi 0, %s30
      %s22 = sphi 0, %s19
      %s23 = sphi 0, %s20
      %s24 = sphi 0, %s21
      %s25 = sphi 0, %s22
      %s26 = sphi 0, %s23
      %s27 = sphi 0, %s24
      %s45 = sphi 0, %s47
      %s48 = sphi 0, %s45
      %s49 = sphi 0, %s48
      %s65 = sphi 0, %s49
      %s71 = sphi 0, %s73
      %s74 = sphi 0, %s71
      %s75 = sphi 0, %s74
      %s91 = sphi 0, %s75
      %s97 = sphi 0, %s99
      %s100 = sphi 0, %s97
      %s101 = sphi 0, %s100
      %s117 = sphi 0, %s101
      %s127 = sphi 0, %s129
      %s130 = sphi 0, %s127
      %s131 = sphi 0, %s130
      %s147 = sphi 0, %s131
    $region4: #{bn_conv2d_forward.3} parent=1 // loop_header_branch
      %15 = sbr.rel (%p13) target = $region8
    $region5: #{bn_conv2d_forward.3} parent=1 // loop_body
      %s17 = ssub.s32 %s12, 1
      %s18 = ssub.s32 %s12, 2
      %s28 = sadd.s32 1, %s21
      %p29 = scmp.ge.s32.totalorder %s28, 1
      %s30 = scalar_select %p29, 0, %s28
      %s31 = sadd.s32 1, %s20
      %s32 = scalar_select %p29, %s31, %s20
      %p33 = scmp.ge.s32.totalorder %s32, 1
      %s34 = scalar_select %p33, 0, %s32
      %s35 = sadd.s32 1, %s19
      %s36 = scalar_select %p33, %s35, %s19
      %p37 = scmp.ge.s32.totalorder %s36, 2
      %s38 = scalar_select %p37, 0, %s36
      %s39 = ssub.s32 %s19, %s38
      %s40 = ssub.s32 %s20, %s34
      %s41 = sor.u32 %s39, %s40
      %s42 = ssub.s32 %s21, %s30
      %s43 = sor.u32 %s41, %s42
      %p44 = scmp.eq.s32.totalorder %s43, 0
      %s46 = sadd.s32 %s45, 1
      %s47 = scalar_select %p44, %s45, %s46
      %p50 = pneg %p44
      %p51 = scmp.eq.s32.totalorder %s12, 1
      %p52 = por %p50, %p51
      %p53 = scmp.ne.s32.totalorder %s45, %s48
      %p54 = scmp.eq.s32.totalorder %s12, 0
      %p55 = por %p53, %p54
      %p56 = scmp.ne.s32.totalorder %s45, %s48
      %p57 = scmp.eq.s32.totalorder %s17, 1
      %p58 = por %p56, %p57
      %p59 = scmp.ne.s32.totalorder %s48, %s49
      %p60 = scmp.eq.s32.totalorder %s17, 0
      %p61 = por %p59, %p60
      %p62 = scmp.ne.s32.totalorder %s48, %s49
      %p63 = scmp.eq.s32.totalorder %s18, 1
      %p64 = por %p62, %p63
      %p66 = scmp.ne.s32.totalorder %s49, %s65
      %p67 = scmp.eq.s32.totalorder %s18, 0
      %p68 = por %p66, %p67
      %s69 = ssub.s32 %s20, %s34
      %p70 = scmp.eq.s32.totalorder %s69, 0
      %s72 = sadd.s32 %s71, 1
      %s73 = scalar_select %p70, %s71, %s72
      %p76 = pneg %p70
      %p77 = scmp.eq.s32.totalorder %s12, 1
      %p78 = por %p76, %p77
      %p79 = scmp.ne.s32.totalorder %s71, %s74
      %p80 = scmp.eq.s32.totalorder %s12, 0
      %p81 = por %p79, %p80
      %p82 = scmp.ne.s32.totalorder %s71, %s74
      %p83 = scmp.eq.s32.totalorder %s17, 1
      %p84 = por %p82, %p83
      %p85 = scmp.ne.s32.totalorder %s74, %s75
      %p86 = scmp.eq.s32.totalorder %s17, 0
      %p87 = por %p85, %p86
      %p88 = scmp.ne.s32.totalorder %s74, %s75
      %p89 = scmp.eq.s32.totalorder %s18, 1
      %p90 = por %p88, %p89
      %p92 = scmp.ne.s32.totalorder %s75, %s91
      %p93 = scmp.eq.s32.totalorder %s18, 0
      %p94 = por %p92, %p93
      %s95 = ssub.s32 %s20, %s34
      %p96 = scmp.eq.s32.totalorder %s95, 0
      %s98 = sadd.s32 %s97, 1
      %s99 = scalar_select %p96, %s97, %s98
      %p102 = pneg %p96
      %p103 = scmp.eq.s32.totalorder %s12, 1
      %p104 = por %p102, %p103
      %p105 = scmp.ne.s32.totalorder %s97, %s100
      %p106 = scmp.eq.s32.totalorder %s12, 0
      %p107 = por %p105, %p106
      %p108 = scmp.ne.s32.totalorder %s97, %s100
      %p109 = scmp.eq.s32.totalorder %s17, 1
      %p110 = por %p108, %p109
      %p111 = scmp.ne.s32.totalorder %s100, %s101
      %p112 = scmp.eq.s32.totalorder %s17, 0
      %p113 = por %p111, %p112
      %p114 = scmp.ne.s32.totalorder %s100, %s101
      %p115 = scmp.eq.s32.totalorder %s18, 1
      %p116 = por %p114, %p115
      %p118 = scmp.ne.s32.totalorder %s101, %s117
      %p119 = scmp.eq.s32.totalorder %s18, 0
      %p120 = por %p118, %p119
      %s121 = ssub.s32 %s19, %s38
      %s122 = ssub.s32 %s20, %s34
      %s123 = sor.u32 %s121, %s122
      %s124 = ssub.s32 %s21, %s30
      %s125 = sor.u32 %s123, %s124
      %p126 = scmp.eq.s32.totalorder %s125, 0
      %s128 = sadd.s32 %s127, 1
      %s129 = scalar_select %p126, %s127, %s128
      %p132 = pneg %p126
      %p133 = scmp.eq.s32.totalorder %s12, 1
      %p134 = por %p132, %p133
      %p135 = scmp.ne.s32.totalorder %s127, %s130
      %p136 = scmp.eq.s32.totalorder %s12, 0
      %p137 = por %p135, %p136
      %p138 = scmp.ne.s32.totalorder %s127, %s130
      %p139 = scmp.eq.s32.totalorder %s17, 1
      %p140 = por %p138, %p139
      %p141 = scmp.ne.s32.totalorder %s130, %s131
      %p142 = scmp.eq.s32.totalorder %s17, 0
      %p143 = por %p141, %p142
      %p144 = scmp.ne.s32.totalorder %s130, %s131
      %p145 = scmp.eq.s32.totalorder %s18, 1
      %p146 = por %p144, %p145
      %p148 = scmp.ne.s32.totalorder %s131, %s147
      %p149 = scmp.eq.s32.totalorder %s18, 0
      %p150 = por %p148, %p149
      %p151 = scmp.le.s32.totalorder 1, %s12
      %p152 = scmp.lt.s32.totalorder %s12, 3
      %p153 = pnand %p151, %p152
      %p154 = pneg %p153
      // Predicated region
      $region9: #{bn_conv2d_forward.3} parent=5 // pred_check
        _
      $region10: #{bn_conv2d_forward.3} parent=5 // pred_check_branch
        %156 = sbr.rel (%p153) target = $region12
      $region11: #{bn_conv2d_forward.3} parent=5 // pred_region
        %s157 = ssub.s32 %s12, 1
        // Predicated region
        $region13: #{bn_conv2d_forward.3} parent=11 // pred_check
          %p158 = pneg %p87
        $region14: #{bn_conv2d_forward.3} parent=11 // pred_check_branch
          %160 = sbr.rel (%p158) target = $region16
        $region15: #{bn_conv2d_forward.3} parent=11 // pred_region
          %s161 = smul.u32 8, %s23
          %p162 = scmp.lt.s32.totalorder %s161, 7
          %s163 = scalar_select %p162, %s161, 7
          %s164 = scalar_lea.vmem %s1, %s163
          %s165 = smul.u32 8, %s23
        $region16: #{bn_conv2d_forward.3} parent=11 // pred_fallthru
          _
        // Predicated region
        $region17: #{bn_conv2d_forward.3} parent=11 // pred_check
          %p166 = pneg %p113
        $region18: #{bn_conv2d_forward.3} parent=11 // pred_check_branch
          %168 = sbr.rel (%p166) target = $region20
        $region19: #{bn_conv2d_forward.3} parent=11 // pred_region
          %s169 = smul.u32 8, %s23
          %p170 = scmp.lt.s32.totalorder %s169, 7
          %s171 = scalar_select %p170, %s169, 7
          %s172 = scalar_lea.vmem %s2, %s171
          %s173 = smul.u32 8, %s23
        $region20: #{bn_conv2d_forward.3} parent=11 // pred_fallthru
          _
      $region12: #{bn_conv2d_forward.3} parent=5 // pred_fallthru
        _
      %p174 = scmp.lt.s32.totalorder %s12, 2
      // Predicated region
      $region21: #{bn_conv2d_forward.3} parent=5 // pred_check
        %p175 = pneg %p174
      $region22: #{bn_conv2d_forward.3} parent=5 // pred_check_branch
        %177 = sbr.rel (%p175) target = $region24
      $region23: #{bn_conv2d_forward.3} parent=5 // pred_region
        // Predicated region
        $region25: #{bn_conv2d_forward.3} parent=23 // pred_check
          %p178 = pneg %p55
        $region26: #{bn_conv2d_forward.3} parent=23 // pred_check_branch
          %180 = sbr.rel (%p178) target = $region28
        $region27: #{bn_conv2d_forward.3} parent=23 // pred_region
          %s181 = smul.u32 8, %s20
          %s182 = smul.u32 2, %s21
          %p183 = scmp.lt.s32.totalorder %s19, 1
          %s184 = scalar_select %p183, %s19, 1
          %p185 = scmp.lt.s32.totalorder %s181, 7
          %s186 = scalar_select %p185, %s181, 7
          %p187 = scmp.lt.s32.totalorder %s182, 1
          %s188 = scalar_select %p187, %s182, 1
          %s189 = smul.addr %s186, 2
          %s190 = sadd.s32 %s188, %s189
          %s191 = smul.addr %s184, 16
          %s192 = sadd.s32 %s190, %s191
          %s193 = smul.addr %s192, 4
          %s194 = scalar_lea.vmem %s0, %s193
          %s195 = smul.u32 8, %s20
          %s196 = smul.u32 2, %s21
        $region28: #{bn_conv2d_forward.3} parent=23 // pred_fallthru
          _
      $region24: #{bn_conv2d_forward.3} parent=5 // pred_fallthru
        _
      %p197 = scmp.le.s32.totalorder 1, %s12
      %p198 = scmp.lt.s32.totalorder %s12, 3
      %p199 = pnand %p197, %p198
      %p200 = pneg %p199
      // Predicated region
      $region29: #{bn_conv2d_forward.3} parent=5 // pred_check
        _
      $region30: #{bn_conv2d_forward.3} parent=5 // pred_check_branch
        %202 = sbr.rel (%p199) target = $region32
      $region31: #{bn_conv2d_forward.3} parent=5 // pred_region
        %s203 = ssub.s32 %s12, 1
        %s204 = smul.u32 8, %s23
        %s205 = smul.u32 2, %s24
        %p206 = scmp.lt.s32.totalorder %s22, 1
        %s207 = scalar_select %p206, %s22, 1
        %p208 = scmp.lt.s32.totalorder %s204, 7
        %s209 = scalar_select %p208, %s204, 7
        %p210 = scmp.lt.s32.totalorder %s205, 1
        %s211 = scalar_select %p210, %s205, 1
        %s212 = smul.addr %s209, 2
        %s213 = sadd.s32 %s211, %s212
        %s214 = smul.addr %s207, 16
        %s215 = sadd.s32 %s213, %s214
        %s216 = smul.addr %s215, 4
        %s217 = scalar_lea.vmem %s0, %s216
        %p218 = pneg %p61
        %p219 = pneg %p58
        %s220 = smul.u32 8, %s23
        %p221 = scmp.lt.s32.totalorder %s220, 7
        %s222 = scalar_select %p221, %s220, 7
        %s223 = scalar_lea.vmem %s1, %s222
        %p224 = pneg %p87
        %p225 = pneg %p84
        %s226 = smul.u32 8, %s23
        %p227 = scmp.lt.s32.totalorder %s226, 7
        %s228 = scalar_select %p227, %s226, 7
        %s229 = scalar_lea.vmem %s2, %s228
        %p230 = pneg %p113
        %p231 = pneg %p110
        %p232 = pneg %p143
        %p233 = pneg %p140
        %s234 = sand.u32 %s130, 1
        %s235 = scalar_lea.sflag [#allocation3], %s234
        %s236 = sand.u32 %s130, 1
        %s237 = smul.addr %s236, 128
        %s238 = scalar_lea.vmem [#allocation2], %s237
        %s239 = smul.u32 8, %s23
        %s240 = smul.u32 2, %s24
        %p241 = scmp.lt.s32.totalorder %s22, 1
        %s242 = scalar_select %p241, %s22, 1
        %p243 = scmp.lt.s32.totalorder %s239, 7
        %s244 = scalar_select %p243, %s239, 7
        %p245 = scmp.lt.s32.totalorder %s240, 1
        %s246 = scalar_select %p245, %s240, 1
        %s247 = smul.addr %s244, 2
        %s248 = sadd.s32 %s246, %s247
        %s249 = smul.addr %s242, 16
        %s250 = sadd.s32 %s248, %s249
        %s251 = smul.addr %s250, 4
        %s252 = scalar_lea.vmem %s0, %s251
        %s253 = smul.u32 8, %s23
        %s254 = smul.u32 2, %s24
        %s255 = smul.u32 8, %s23
        %p256 = scmp.lt.s32.totalorder %s255, 7
        %s257 = scalar_select %p256, %s255, 7
        %s258 = scalar_lea.vmem %s1, %s257
        %s259 = smul.u32 8, %s23
        %s260 = smul.u32 8, %s23
        %p261 = scmp.lt.s32.totalorder %s260, 7
        %s262 = scalar_select %p261, %s260, 7
        %s263 = scalar_lea.vmem %s2, %s262
        %s264 = smul.u32 8, %s23
        %s265 = smul.u32 8, %s23
        %s266 = smul.u32 2, %s24
        %v267 = vld [vmem:[%s252] sm:$0xf]
        %v268 = vld [vmem:[%s252 + $0x4] sm:$0xf]
        %v269 = vld [vmem:[%s252 + $0x8] sm:$0xf]
        %v270 = vld [vmem:[%s252 + $0xc] sm:$0xf]
        %v271 = vld [vmem:[%s252 + $0x10] sm:$0xf]
        %v272 = vld [vmem:[%s252 + $0x14] sm:$0xf]
        %v273 = vld [vmem:[%s252 + $0x18] sm:$0xf]
        %v274 = vld [vmem:[%s252 + $0x1c] sm:$0xf]
        %v275 = vld [vmem:[%s252 + $0x20] sm:$0xf]
        %v276 = vld [vmem:[%s252 + $0x24] sm:$0xf]
        %v277 = vld [vmem:[%s252 + $0x28] sm:$0xf]
        %v278 = vld [vmem:[%s252 + $0x2c] sm:$0xf]
        %v279 = vld [vmem:[%s252 + $0x30] sm:$0xf]
        %v280 = vld [vmem:[%s252 + $0x34] sm:$0xf]
        %v281 = vld [vmem:[%s252 + $0x38] sm:$0xf]
        %v282 = vld [vmem:[%s252 + $0x3c] sm:$0xf]
        %v283 = vunpack.c.l.bf16 %v267
        %v284 = vunpack.c.l.bf16 %v268
        %v285 = vunpack.c.l.bf16 %v269
        %v286 = vunpack.c.l.bf16 %v270
        %v287 = vunpack.c.l.bf16 %v271
        %v288 = vunpack.c.l.bf16 %v272
        %v289 = vunpack.c.l.bf16 %v273
        %v290 = vunpack.c.l.bf16 %v274
        %v291 = vunpack.c.l.bf16 %v275
        %v292 = vunpack.c.l.bf16 %v276
        %v293 = vunpack.c.l.bf16 %v277
        %v294 = vunpack.c.l.bf16 %v278
        %v295 = vunpack.c.l.bf16 %v279
        %v296 = vunpack.c.l.bf16 %v280
        %v297 = vunpack.c.l.bf16 %v281
        %v298 = vunpack.c.l.bf16 %v282
        %v299 = vld [vmem:[%s258] sm:$0x1]
        %v300 = vld [vmem:[%s258 + $0x1] sm:$0x1]
        %v301 = vld [vmem:[%s258 + $0x2] sm:$0x1]
        %v302 = vld [vmem:[%s258 + $0x3] sm:$0x1]
        %v303 = vld [vmem:[%s258 + $0x4] sm:$0x1]
        %v304 = vld [vmem:[%s258 + $0x5] sm:$0x1]
        %v305 = vld [vmem:[%s258 + $0x6] sm:$0x1]
        %v306 = vld [vmem:[%s258 + $0x7] sm:$0x1]
        %v315 = vlaneseq
        %v316 = vshrl.u32 %v315, 7
        %v317 = vsub.s32 0, %v316
        %v318 = vrot.slane %v299, %v317
        %v319 = vlaneseq
        %v320 = vshrl.u32 %v319, 7
        %v321 = vsub.s32 0, %v320
        %v322 = vrot.slane %v300, %v321
        %v323 = vlaneseq
        %v324 = vshrl.u32 %v323, 7
        %v325 = vsub.s32 0, %v324
        %v326 = vrot.slane %v301, %v325
        %v327 = vlaneseq
        %v328 = vshrl.u32 %v327, 7
        %v329 = vsub.s32 0, %v328
        %v330 = vrot.slane %v302, %v329
        %v331 = vlaneseq
        %v332 = vshrl.u32 %v331, 7
        %v333 = vsub.s32 0, %v332
        %v334 = vrot.slane %v303, %v333
        %v335 = vlaneseq
        %v336 = vshrl.u32 %v335, 7
        %v337 = vsub.s32 0, %v336
        %v338 = vrot.slane %v304, %v337
        %v339 = vlaneseq
        %v340 = vshrl.u32 %v339, 7
        %v341 = vsub.s32 0, %v340
        %v342 = vrot.slane %v305, %v341
        %v343 = vlaneseq
        %v344 = vshrl.u32 %v343, 7
        %v345 = vsub.s32 0, %v344
        %v346 = vrot.slane %v306, %v345
        %347 = vset.pattern.permute.xlu0 0
        %348 = vperm.xlu0 %347, %v318
        %v349 = vpop.permute.xlu0 %348
        %351 = vset.pattern.permute.xlu0 0
        %352 = vperm.xlu0 %351, %v322
        %v353 = vpop.permute.xlu0 %352
        %355 = vset.pattern.permute.xlu0 0
        %356 = vperm.xlu0 %355, %v326
        %v357 = vpop.permute.xlu0 %356
        %359 = vset.pattern.permute.xlu0 0
        %360 = vperm.xlu0 %359, %v330
        %v361 = vpop.permute.xlu0 %360
        %363 = vset.pattern.permute.xlu0 0
        %364 = vperm.xlu0 %363, %v334
        %v365 = vpop.permute.xlu0 %364
        %367 = vset.pattern.permute.xlu0 0
        %368 = vperm.xlu0 %367, %v338
        %v369 = vpop.permute.xlu0 %368
        %371 = vset.pattern.permute.xlu0 0
        %372 = vperm.xlu0 %371, %v342
        %v373 = vpop.permute.xlu0 %372
        %375 = vset.pattern.permute.xlu0 0
        %376 = vperm.xlu0 %375, %v346
        %v377 = vpop.permute.xlu0 %376
        %v379 = vmul.f32 %v283, %v349
        %v380 = vmul.f32 %v284, %v349
        %v381 = vmul.f32 %v285, %v353
        %v382 = vmul.f32 %v286, %v353
        %v383 = vmul.f32 %v287, %v357
        %v384 = vmul.f32 %v288, %v357
        %v385 = vmul.f32 %v289, %v361
        %v386 = vmul.f32 %v290, %v361
        %v387 = vmul.f32 %v291, %v365
        %v388 = vmul.f32 %v292, %v365
        %v389 = vmul.f32 %v293, %v369
        %v390 = vmul.f32 %v294, %v369
        %v391 = vmul.f32 %v295, %v373
        %v392 = vmul.f32 %v296, %v373
        %v393 = vmul.f32 %v297, %v377
        %v394 = vmul.f32 %v298, %v377
        %v395 = vld [vmem:[%s263] sm:$0x1]
        %v396 = vld [vmem:[%s263 + $0x1] sm:$0x1]
        %v397 = vld [vmem:[%s263 + $0x2] sm:$0x1]
        %v398 = vld [vmem:[%s263 + $0x3] sm:$0x1]
        %v399 = vld [vmem:[%s263 + $0x4] sm:$0x1]
        %v400 = vld [vmem:[%s263 + $0x5] sm:$0x1]
        %v401 = vld [vmem:[%s263 + $0x6] sm:$0x1]
        %v402 = vld [vmem:[%s263 + $0x7] sm:$0x1]
        %v411 = vlaneseq
        %v412 = vshrl.u32 %v411, 7
        %v413 = vsub.s32 0, %v412
        %v414 = vrot.slane %v395, %v413
        %v415 = vlaneseq
        %v416 = vshrl.u32 %v415, 7
        %v417 = vsub.s32 0, %v416
        %v418 = vrot.slane %v396, %v417
        %v419 = vlaneseq
        %v420 = vshrl.u32 %v419, 7
        %v421 = vsub.s32 0, %v420
        %v422 = vrot.slane %v397, %v421
        %v423 = vlaneseq
        %v424 = vshrl.u32 %v423, 7
        %v425 = vsub.s32 0, %v424
        %v426 = vrot.slane %v398, %v425
        %v427 = vlaneseq
        %v428 = vshrl.u32 %v427, 7
        %v429 = vsub.s32 0, %v428
        %v430 = vrot.slane %v399, %v429
        %v431 = vlaneseq
        %v432 = vshrl.u32 %v431, 7
        %v433 = vsub.s32 0, %v432
        %v434 = vrot.slane %v400, %v433
        %v435 = vlaneseq
        %v436 = vshrl.u32 %v435, 7
        %v437 = vsub.s32 0, %v436
        %v438 = vrot.slane %v401, %v437
        %v439 = vlaneseq
        %v440 = vshrl.u32 %v439, 7
        %v441 = vsub.s32 0, %v440
        %v442 = vrot.slane %v402, %v441
        %443 = vset.pattern.permute.xlu0 0
        %444 = vperm.xlu0 %443, %v414
        %v445 = vpop.permute.xlu0 %444
        %447 = vset.pattern.permute.xlu0 0
        %448 = vperm.xlu0 %447, %v418
        %v449 = vpop.permute.xlu0 %448
        %451 = vset.pattern.permute.xlu0 0
        %452 = vperm.xlu0 %451, %v422
        %v453 = vpop.permute.xlu0 %452
        %455 = vset.pattern.permute.xlu0 0
        %456 = vperm.xlu0 %455, %v426
        %v457 = vpop.permute.xlu0 %456
        %459 = vset.pattern.permute.xlu0 0
        %460 = vperm.xlu0 %459, %v430
        %v461 = vpop.permute.xlu0 %460
        %463 = vset.pattern.permute.xlu0 0
        %464 = vperm.xlu0 %463, %v434
        %v465 = vpop.permute.xlu0 %464
        %467 = vset.pattern.permute.xlu0 0
        %468 = vperm.xlu0 %467, %v438
        %v469 = vpop.permute.xlu0 %468
        %471 = vset.pattern.permute.xlu0 0
        %472 = vperm.xlu0 %471, %v442
        %v473 = vpop.permute.xlu0 %472
        %v475 = vadd.f32 %v379, %v445
        %v476 = vadd.f32 %v380, %v445
        %v477 = vadd.f32 %v381, %v449
        %v478 = vadd.f32 %v382, %v449
        %v479 = vadd.f32 %v383, %v453
        %v480 = vadd.f32 %v384, %v453
        %v481 = vadd.f32 %v385, %v457
        %v482 = vadd.f32 %v386, %v457
        %v483 = vadd.f32 %v387, %v461
        %v484 = vadd.f32 %v388, %v461
        %v485 = vadd.f32 %v389, %v465
        %v486 = vadd.f32 %v390, %v465
        %v487 = vadd.f32 %v391, %v469
        %v488 = vadd.f32 %v392, %v469
        %v489 = vadd.f32 %v393, %v473
        %v490 = vadd.f32 %v394, %v473
        %v491 = vmax.f32 %v475, 0.0
        %v492 = vmax.f32 %v476, 0.0
        %v493 = vmax.f32 %v477, 0.0
        %v494 = vmax.f32 %v478, 0.0
        %v495 = vmax.f32 %v479, 0.0
        %v496 = vmax.f32 %v480, 0.0
        %v497 = vmax.f32 %v481, 0.0
        %v498 = vmax.f32 %v482, 0.0
        %v499 = vmax.f32 %v483, 0.0
        %v500 = vmax.f32 %v484, 0.0
        %v501 = vmax.f32 %v485, 0.0
        %v502 = vmax.f32 %v486, 0.0
        %v503 = vmax.f32 %v487, 0.0
        %v504 = vmax.f32 %v488, 0.0
        %v505 = vmax.f32 %v489, 0.0
        %v506 = vmax.f32 %v490, 0.0
        %vm507 = vcmask 130048
        %508 = vst.msk [vmem:[%s238] sm:$0xff] %vm507, %v491
        %509 = vst.msk [vmem:[%s238 + $0x8] sm:$0xff] %vm507, %v492
        %510 = vst.msk [vmem:[%s238 + $0x10] sm:$0xff] %vm507, %v493
        %511 = vst.msk [vmem:[%s238 + $0x18] sm:$0xff] %vm507, %v494
        %512 = vst.msk [vmem:[%s238 + $0x20] sm:$0xff] %vm507, %v495
        %513 = vst.msk [vmem:[%s238 + $0x28] sm:$0xff] %vm507, %v496
        %514 = vst.msk [vmem:[%s238 + $0x30] sm:$0xff] %vm507, %v497
        %515 = vst.msk [vmem:[%s238 + $0x38] sm:$0xff] %vm507, %v498
        %516 = vst.msk [vmem:[%s238 + $0x40] sm:$0xff] %vm507, %v499
        %517 = vst.msk [vmem:[%s238 + $0x48] sm:$0xff] %vm507, %v500
        %518 = vst.msk [vmem:[%s238 + $0x50] sm:$0xff] %vm507, %v501
        %519 = vst.msk [vmem:[%s238 + $0x58] sm:$0xff] %vm507, %v502
        %520 = vst.msk [vmem:[%s238 + $0x60] sm:$0xff] %vm507, %v503
        %521 = vst.msk [vmem:[%s238 + $0x68] sm:$0xff] %vm507, %v504
        %522 = vst.msk [vmem:[%s238 + $0x70] sm:$0xff] %vm507, %v505
        %523 = vst.msk [vmem:[%s238 + $0x78] sm:$0xff] %vm507, %v506
        %s524 = sand.u32 %s130, 1
        %s525 = scalar_lea.sflag [#allocation3], %s524
        %s526 = sand.u32 %s130, 1
        %s527 = smul.addr %s526, 128
        %s528 = scalar_lea.vmem [#allocation2], %s527
        // Predicated region
        $region33: #{bn_conv2d_forward.3} parent=31 // pred_check
          %p529 = pneg %p140
        $region34: #{bn_conv2d_forward.3} parent=31 // pred_check_branch
          %531 = sbr.rel (%p529) target = $region36
        $region35: #{bn_conv2d_forward.3} parent=31 // pred_region
          %s532 = smul.u32 8, %s23
          %s533 = smul.u32 2, %s24
          %s535 = ssub.s32 2048, 2048
          %536 = vsyncadd %s525, %s535
          %s537 = smul.addr %s532, 2
          %s538 = sadd.s32 %s533, %s537
          %s539 = smul.addr %s22, 16
          %s540 = sadd.s32 %s538, %s539
          %s541 = smul.addr %s540, 128
          %s542 = scalar_lea.hbm %s3, %s541
          %s543 = sshll.u32 %s528, 4
          %s544 = int_to_ptr.vmem [resolvable:$true] %s543
          %549 = dma.vmem_to_hbm [thread:$0]  %s544, 2048, %s542, %s525, 128, 128, 8
        $region36: #{bn_conv2d_forward.3} parent=31 // pred_fallthru
          _
      $region32: #{bn_conv2d_forward.3} parent=5 // pred_fallthru
        _
      %p550 = scmp.le.s32.totalorder 2, %s12
      // Predicated region
      $region37: #{bn_conv2d_forward.3} parent=5 // pred_check
        %p551 = pneg %p550
      $region38: #{bn_conv2d_forward.3} parent=5 // pred_check_branch
        %553 = sbr.rel (%p551) target = $region40
      $region39: #{bn_conv2d_forward.3} parent=5 // pred_region
        %s554 = ssub.s32 %s12, 2
        // Predicated region
        $region41: #{bn_conv2d_forward.3} parent=39 // pred_check
          %p555 = pneg %p146
        $region42: #{bn_conv2d_forward.3} parent=39 // pred_check_branch
          %557 = sbr.rel (%p555) target = $region44
        $region43: #{bn_conv2d_forward.3} parent=39 // pred_region
          %s558 = sand.u32 %s131, 1
          %s559 = scalar_lea.sflag [#allocation3], %s558
          %s560 = sand.u32 %s131, 1
          %s561 = smul.addr %s560, 128
          %s562 = scalar_lea.vmem [#allocation2], %s561
          %563 = dma.done %s559, 2048
        $region44: #{bn_conv2d_forward.3} parent=39 // pred_fallthru
          _
      $region40: #{bn_conv2d_forward.3} parent=5 // pred_fallthru
        _
    $region6: #{bn_conv2d_forward.3} parent=1 // loop_footer
      %s16 = sadd.s32 1, %s12
    $region7: #{bn_conv2d_forward.3} parent=1 // loop_footer_branch
      %11 = sbr.rel target = $region3
    $region8: #{bn_conv2d_forward.3} parent=1 // loop_exit
      _
    %564 = vsyncpa [#allocation3], 1
    %s565 = scalar_lea.sflag [#allocation3], 1
    %566 = vsyncpa %s565, 1

// kernel: bn_conv2d_forward.2
$region0: #{bn_conv2d_forward.2}
  #allocation0 [shape = 'u32[]', space=smem, size = 0x4, offset = 0x4, fixed_abs, tag = 'smem constant byte address 0x4 - core index']
  #allocation1 [shape = 'u32[144,128]{1,0:T(1,128)}', space=vmem, size = 0x12000, scoped, tag = 'internal scratch']
  %s0 = inlined_call_operand.vmem [shape: f32[1,288], index: 0, kind: input, shape index: {}]
  %s1 = inlined_call_operand.vmem [shape: bf16[2,1,1,4,384], index: 1, kind: input, shape index: {}]
  %s2 = inlined_call_operand.vmem [shape: bf16[1,9,8,4], index: 2, kind: input, shape index: {}]
  %s3 = inlined_call_operand.vmem [shape: bf16[2,8,288], index: 3, kind: output, shape index: {0}]
  %s4 = inlined_call_operand.vmem [shape: f32[2,8,1], index: 4, kind: output, shape index: {1}]
  %s5 = inlined_call_operand.vmem [shape: f32[2,8,1], index: 5, kind: output, shape index: {2}]
  %6 = xla_tuple %s3, %s4, %s5
  %s7 = sld [smem:[#allocation0]]
  $region61: #{bn_conv2d_forward.2} parent=0
    _
  %s9 = ssub.s32 1, %s7
  %s10 = scalar_select 0, %s9, %s7
  loop: start=0, step=1, limit=4
  $region2: #{bn_conv2d_forward.2} parent=0 // loop_pre_header
    _
  $region3: #{bn_conv2d_forward.2} parent=0 // loop_header
    %s12 = sphi 0, %s16
    %p13 = scmp.ge.s32.totalorder %s12, 4
    %s19 = sphi 0, %s31
    %s20 = sphi 0, %s27
    %s21 = sphi 0, %s19
    %s22 = sphi 0, %s20
    %s23 = sphi 0, %s21
    %s24 = sphi 0, %s22
    %s32 = sphi 0, %s32
    %s34 = sphi 0, %s32
    %s35 = sphi 0, %s34
    %s49 = sphi 0, %s35
    %s57 = sphi 0, %s59
    %s60 = sphi 0, %s57
    %s61 = sphi 0, %s60
    %s77 = sphi 0, %s61
    %s83 = sphi 0, %s85
    %s86 = sphi 0, %s83
    %s87 = sphi 0, %s86
    %s103 = sphi 0, %s87
    %s111 = sphi 0, %s113
    %s114 = sphi 0, %s111
    %s115 = sphi 0, %s114
    %s131 = sphi 0, %s115
    %s139 = sphi 0, %s141
    %s142 = sphi 0, %s139
    %s143 = sphi 0, %s142
    %s159 = sphi 0, %s143
    %s167 = sphi 0, %s169
    %s170 = sphi 0, %s167
    %s171 = sphi 0, %s170
    %s187 = sphi 0, %s171
  $region4: #{bn_conv2d_forward.2} parent=0 // loop_header_branch
    %15 = sbr.rel (%p13) target = $region8
  $region5: #{bn_conv2d_forward.2} parent=0 // loop_body
    %s17 = ssub.s32 %s12, 1
    %s18 = ssub.s32 %s12, 2
    %s25 = sadd.s32 1, %s20
    %p26 = scmp.ge.s32.totalorder %s25, 2
    %s27 = scalar_select %p26, 0, %s25
    %s28 = sadd.s32 1, %s19
    %s29 = scalar_select %p26, %s28, %s19
    %p30 = scmp.ge.s32.totalorder %s29, 1
    %s31 = scalar_select %p30, 0, %s29
    %s33 = sadd.s32 %s32, 1
    %p36 = scmp.eq.s32.totalorder %s12, 1
    %p37 = scmp.ne.s32.totalorder %s32, %s34
    %p38 = scmp.eq.s32.totalorder %s12, 0
    %p39 = por %p37, %p38
    %p40 = scmp.ne.s32.totalorder %s32, %s34
    %p41 = scmp.eq.s32.totalorder %s17, 1
    %p42 = por %p40, %p41
    %p43 = scmp.ne.s32.totalorder %s34, %s35
    %p44 = scmp.eq.s32.totalorder %s17, 0
    %p45 = por %p43, %p44
    %p46 = scmp.ne.s32.totalorder %s34, %s35
    %p47 = scmp.eq.s32.totalorder %s18, 1
    %p48 = por %p46, %p47
    %p50 = scmp.ne.s32.totalorder %s35, %s49
    %p51 = scmp.eq.s32.totalorder %s18, 0
    %p52 = por %p50, %p51
    %s53 = ssub.s32 %s20, %s27
    %s54 = ssub.s32 %s19, %s31
    %s55 = sor.u32 %s53, %s54
    %p56 = scmp.eq.s32.totalorder %s55, 0
    %s58 = sadd.s32 %s57, 1
    %s59 = scalar_select %p56, %s57, %s58
    %p62 = pneg %p56
    %p63 = scmp.eq.s32.totalorder %s12, 1
    %p64 = por %p62, %p63
    %p65 = scmp.ne.s32.totalorder %s57, %s60
    %p66 = scmp.eq.s32.totalorder %s12, 0
    %p67 = por %p65, %p66
    %p68 = scmp.ne.s32.totalorder %s57, %s60
    %p69 = scmp.eq.s32.totalorder %s17, 1
    %p70 = por %p68, %p69
    %p71 = scmp.ne.s32.totalorder %s60, %s61
    %p72 = scmp.eq.s32.totalorder %s17, 0
    %p73 = por %p71, %p72
    %p74 = scmp.ne.s32.totalorder %s60, %s61
    %p75 = scmp.eq.s32.totalorder %s18, 1
    %p76 = por %p74, %p75
    %p78 = scmp.ne.s32.totalorder %s61, %s77
    %p79 = scmp.eq.s32.totalorder %s18, 0
    %p80 = por %p78, %p79
    %s81 = ssub.s32 %s19, %s31
    %p82 = scmp.eq.s32.totalorder %s81, 0
    %s84 = sadd.s32 %s83, 1
    %s85 = scalar_select %p82, %s83, %s84
    %p88 = pneg %p82
    %p89 = scmp.eq.s32.totalorder %s12, 1
    %p90 = por %p88, %p89
    %p91 = scmp.ne.s32.totalorder %s83, %s86
    %p92 = scmp.eq.s32.totalorder %s12, 0
    %p93 = por %p91, %p92
    %p94 = scmp.ne.s32.totalorder %s83, %s86
    %p95 = scmp.eq.s32.totalorder %s17, 1
    %p96 = por %p94, %p95
    %p97 = scmp.ne.s32.totalorder %s86, %s87
    %p98 = scmp.eq.s32.totalorder %s17, 0
    %p99 = por %p97, %p98
    %p100 = scmp.ne.s32.totalorder %s86, %s87
    %p101 = scmp.eq.s32.totalorder %s18, 1
    %p102 = por %p100, %p101
    %p104 = scmp.ne.s32.totalorder %s87, %s103
    %p105 = scmp.eq.s32.totalorder %s18, 0
    %p106 = por %p104, %p105
    %s107 = ssub.s32 %s20, %s27
    %s108 = ssub.s32 %s19, %s31
    %s109 = sor.u32 %s107, %s108
    %p110 = scmp.eq.s32.totalorder %s109, 0
    %s112 = sadd.s32 %s111, 1
    %s113 = scalar_select %p110, %s111, %s112
    %p116 = pneg %p110
    %p117 = scmp.eq.s32.totalorder %s12, 1
    %p118 = por %p116, %p117
    %p119 = scmp.ne.s32.totalorder %s111, %s114
    %p120 = scmp.eq.s32.totalorder %s12, 0
    %p121 = por %p119, %p120
    %p122 = scmp.ne.s32.totalorder %s111, %s114
    %p123 = scmp.eq.s32.totalorder %s17, 1
    %p124 = por %p122, %p123
    %p125 = scmp.ne.s32.totalorder %s114, %s115
    %p126 = scmp.eq.s32.totalorder %s17, 0
    %p127 = por %p125, %p126
    %p128 = scmp.ne.s32.totalorder %s114, %s115
    %p129 = scmp.eq.s32.totalorder %s18, 1
    %p130 = por %p128, %p129
    %p132 = scmp.ne.s32.totalorder %s115, %s131
    %p133 = scmp.eq.s32.totalorder %s18, 0
    %p134 = por %p132, %p133
    %s135 = ssub.s32 %s20, %s27
    %s136 = ssub.s32 %s19, %s31
    %s137 = sor.u32 %s135, %s136
    %p138 = scmp.eq.s32.totalorder %s137, 0
    %s140 = sadd.s32 %s139, 1
    %s141 = scalar_select %p138, %s139, %s140
    %p144 = pneg %p138
    %p145 = scmp.eq.s32.totalorder %s12, 1
    %p146 = por %p144, %p145
    %p147 = scmp.ne.s32.totalorder %s139, %s142
    %p148 = scmp.eq.s32.totalorder %s12, 0
    %p149 = por %p147, %p148
    %p150 = scmp.ne.s32.totalorder %s139, %s142
    %p151 = scmp.eq.s32.totalorder %s17, 1
    %p152 = por %p150, %p151
    %p153 = scmp.ne.s32.totalorder %s142, %s143
    %p154 = scmp.eq.s32.totalorder %s17, 0
    %p155 = por %p153, %p154
    %p156 = scmp.ne.s32.totalorder %s142, %s143
    %p157 = scmp.eq.s32.totalorder %s18, 1
    %p158 = por %p156, %p157
    %p160 = scmp.ne.s32.totalorder %s143, %s159
    %p161 = scmp.eq.s32.totalorder %s18, 0
    %p162 = por %p160, %p161
    %s163 = ssub.s32 %s20, %s27
    %s164 = ssub.s32 %s19, %s31
    %s165 = sor.u32 %s163, %s164
    %p166 = scmp.eq.s32.totalorder %s165, 0
    %s168 = sadd.s32 %s167, 1
    %s169 = scalar_select %p166, %s167, %s168
    %p172 = pneg %p166
    %p173 = scmp.eq.s32.totalorder %s12, 1
    %p174 = por %p172, %p173
    %p175 = scmp.ne.s32.totalorder %s167, %s170
    %p176 = scmp.eq.s32.totalorder %s12, 0
    %p177 = por %p175, %p176
    %p178 = scmp.ne.s32.totalorder %s167, %s170
    %p179 = scmp.eq.s32.totalorder %s17, 1
    %p180 = por %p178, %p179
    %p181 = scmp.ne.s32.totalorder %s170, %s171
    %p182 = scmp.eq.s32.totalorder %s17, 0
    %p183 = por %p181, %p182
    %p184 = scmp.ne.s32.totalorder %s170, %s171
    %p185 = scmp.eq.s32.totalorder %s18, 1
    %p186 = por %p184, %p185
    %p188 = scmp.ne.s32.totalorder %s171, %s187
    %p189 = scmp.eq.s32.totalorder %s18, 0
    %p190 = por %p188, %p189
    %p191 = scmp.le.s32.totalorder 1, %s12
    %p192 = scmp.lt.s32.totalorder %s12, 3
    %p193 = pnand %p191, %p192
    %p194 = pneg %p193
    // Predicated region
    $region9: #{bn_conv2d_forward.2} parent=5 // pred_check
      _
    $region10: #{bn_conv2d_forward.2} parent=5 // pred_check_branch
      %196 = sbr.rel (%p193) target = $region12
    $region11: #{bn_conv2d_forward.2} parent=5 // pred_region
      %s197 = ssub.s32 %s12, 1
      // Predicated region
      $region13: #{bn_conv2d_forward.2} parent=11 // pred_check
        %p198 = pneg %p45
      $region14: #{bn_conv2d_forward.2} parent=11 // pred_check_branch
        %200 = sbr.rel (%p198) target = $region16
      $region15: #{bn_conv2d_forward.2} parent=11 // pred_region
        _
      $region16: #{bn_conv2d_forward.2} parent=11 // pred_fallthru
        _
      // Predicated region
      $region17: #{bn_conv2d_forward.2} parent=11 // pred_check
        %p201 = pneg %p99
      $region18: #{bn_conv2d_forward.2} parent=11 // pred_check_branch
        %203 = sbr.rel (%p201) target = $region20
      $region19: #{bn_conv2d_forward.2} parent=11 // pred_region
        %p204 = scmp.lt.s32.totalorder %s21, 0
        %s205 = scalar_select %p204, %s21, 0
        %s206 = smul.addr %s205, 9
        %s207 = smul.addr %s206, 4
        %s208 = scalar_lea.vmem %s2, %s207
      $region20: #{bn_conv2d_forward.2} parent=11 // pred_fallthru
        _
    $region12: #{bn_conv2d_forward.2} parent=5 // pred_fallthru
      _
    %p209 = scmp.lt.s32.totalorder %s12, 2
    // Predicated region
    $region21: #{bn_conv2d_forward.2} parent=5 // pred_check
      %p210 = pneg %p209
    $region22: #{bn_conv2d_forward.2} parent=5 // pred_check_branch
      %212 = sbr.rel (%p210) target = $region24
    $region23: #{bn_conv2d_forward.2} parent=5 // pred_region
      // Predicated region
      $region25: #{bn_conv2d_forward.2} parent=23 // pred_check
        %p213 = pneg %p67
      $region26: #{bn_conv2d_forward.2} parent=23 // pred_check_branch
        %215 = sbr.rel (%p213) target = $region28
      $region27: #{bn_conv2d_forward.2} parent=23 // pred_region
        %p216 = scmp.lt.s32.totalorder %s20, 1
        %s217 = scalar_select %p216, %s20, 1
        %p218 = scmp.lt.s32.totalorder %s19, 0
        %s219 = scalar_select %p218, %s19, 0
        %s220 = smul.addr %s219, 3
        %s221 = smul.addr %s217, 3
        %s222 = sadd.s32 %s220, %s221
        %s223 = smul.addr %s222, 2
        %s224 = scalar_lea.vmem %s1, %s223
      $region28: #{bn_conv2d_forward.2} parent=23 // pred_fallthru
        _
    $region24: #{bn_conv2d_forward.2} parent=5 // pred_fallthru
      _
    %p225 = scmp.le.s32.totalorder 1, %s12
    %p226 = scmp.lt.s32.totalorder %s12, 3
    %p227 = pnand %p225, %p226
    %p228 = pneg %p227
    // Predicated region
    $region29: #{bn_conv2d_forward.2} parent=5 // pred_check
      _
    $region30: #{bn_conv2d_forward.2} parent=5 // pred_check_branch
      %230 = sbr.rel (%p227) target = $region32
    $region31: #{bn_conv2d_forward.2} parent=5 // pred_region
      %s231 = ssub.s32 %s12, 1
      %p232 = pneg %p45
      %p233 = pneg %p42
      %p234 = scmp.lt.s32.totalorder %s22, 1
      %s235 = scalar_select %p234, %s22, 1
      %p236 = scmp.lt.s32.totalorder %s21, 0
      %s237 = scalar_select %p236, %s21, 0
      %s238 = smul.addr %s237, 3
      %s239 = smul.addr %s235, 3
      %s240 = sadd.s32 %s238, %s239
      %s241 = smul.addr %s240, 2
      %s242 = scalar_lea.vmem %s1, %s241
      %p243 = pneg %p73
      %p244 = pneg %p70
      %p245 = scmp.lt.s32.totalorder %s21, 0
      %s246 = scalar_select %p245, %s21, 0
      %s247 = smul.addr %s246, 9
      %s248 = smul.addr %s247, 4
      %s249 = scalar_lea.vmem %s2, %s248
      %p250 = pneg %p99
      %p251 = pneg %p96
      %p252 = pneg %p127
      %p253 = pneg %p124
      %p254 = scmp.lt.s32.totalorder %s22, 1
      %s255 = scalar_select %p254, %s22, 1
      %p256 = scmp.lt.s32.totalorder %s21, 0
      %s257 = scalar_select %p256, %s21, 0
      %s258 = smul.addr %s257, 3
      %s259 = smul.addr %s255, 3
      %s260 = sadd.s32 %s258, %s259
      %s261 = smul.addr %s260, 4
      %s262 = scalar_lea.vmem %s3, %s261
      %p263 = pneg %p155
      %p264 = pneg %p152
      %p265 = scmp.lt.s32.totalorder %s22, 1
      %s266 = scalar_select %p265, %s22, 1
      %p267 = scmp.lt.s32.totalorder %s21, 0
      %s268 = scalar_select %p267, %s21, 0
      %s269 = sadd.s32 %s268, %s266
      %s270 = smul.addr %s269, 8
      %s271 = scalar_lea.vmem %s4, %s270
      %p272 = pneg %p183
      %p273 = pneg %p180
      %p274 = scmp.lt.s32.totalorder %s22, 1
      %s275 = scalar_select %p274, %s22, 1
      %p276 = scmp.lt.s32.totalorder %s21, 0
      %s277 = scalar_select %p276, %s21, 0
      %s278 = sadd.s32 %s277, %s275
      %s279 = smul.addr %s278, 8
      %s280 = scalar_lea.vmem %s5, %s279
      %p281 = scmp.lt.s32.totalorder %s22, 1
      %s282 = scalar_select %p281, %s22, 1
      %p283 = scmp.lt.s32.totalorder %s21, 0
      %s284 = scalar_select %p283, %s21, 0
      %s285 = smul.addr %s284, 3
      %s286 = smul.addr %s282, 3
      %s287 = sadd.s32 %s285, %s286
      %s288 = smul.addr %s287, 2
      %s289 = scalar_lea.vmem %s1, %s288
      %p290 = scmp.lt.s32.totalorder %s21, 0
      %s291 = scalar_select %p290, %s21, 0
      %s292 = smul.addr %s291, 9
      %s293 = smul.addr %s292, 4
      %s294 = scalar_lea.vmem %s2, %s293
      %p295 = scmp.lt.s32.totalorder %s22, 1
      %s296 = scalar_select %p295, %s22, 1
      %p297 = scmp.lt.s32.totalorder %s21, 0
      %s298 = scalar_select %p297, %s21, 0
      %s299 = smul.addr %s298, 3
      %s300 = smul.addr %s296, 3
      %s301 = sadd.s32 %s299, %s300
      %s302 = smul.addr %s301, 4
      %s303 = scalar_lea.vmem %s3, %s302
      %p304 = scmp.lt.s32.totalorder %s22, 1
      %s305 = scalar_select %p304, %s22, 1
      %p306 = scmp.lt.s32.totalorder %s21, 0
      %s307 = scalar_select %p306, %s21, 0
      %s308 = sadd.s32 %s307, %s305
      %s309 = smul.addr %s308, 8
      %s310 = scalar_lea.vmem %s4, %s309
      %p311 = scmp.lt.s32.totalorder %s22, 1
      %s312 = scalar_select %p311, %s22, 1
      %p313 = scmp.lt.s32.totalorder %s21, 0
      %s314 = scalar_select %p313, %s21, 0
      %s315 = sadd.s32 %s314, %s312
      %s316 = smul.addr %s315, 8
      %s317 = scalar_lea.vmem %s5, %s316
      %v319 = vld [vmem:[%s289] sm:$0x3f]
      %v320 = vld [vmem:[%s294] sm:$0xf]
      %s321 = scalar_lea.vmem %s294, 4
      %v322 = vld [vmem:[%s321] sm:$0xf]
      %v324 = vcombine.high %v319, %v319
      %v326 = vunpack.c.l.s4 1983009808
      %v327 = vunpack.c.0.s8 %v326
      %v328 = vlaneseq
      %v329 = vshrl.u32 %v328, 7
      %v330 = vsub.s32 %v327, %v329
      %v331 = vrot.slane %v319, %v330
      %v333 = vunpack.c.l.s4 1983009808
      %v334 = vunpack.c.0.s8 %v333
      %v335 = vlaneseq
      %v336 = vshrl.u32 %v335, 7
      %v337 = vsub.s32 %v334, %v336
      %v338 = vrot.slane %v324, %v337
      %v339 = vcombine.high %v331, %v331
      %340 = vrot.lane.b32.xlu0 %v331, 127
      %v341 = vpop.permute.xlu0 %340
      %342 = vrot.lane.b32.xlu0 %v339, 127
      %v343 = vpop.permute.xlu0 %342
      %344 = vrot.lane.b32.xlu0 %v338, 127
      %v345 = vpop.permute.xlu0 %344
      %vm346 = vcmask 1039360
      %v347 = vsel %vm346, %v341, %v343
      %v348 = vsel %vm346, %v343, %v345
      %vm349 = vcmask 31744
      %v351 = vsel %vm349, %v322, 0
      %vm353 = vcmask 1041408
      %v355 = vsel %vm353, %v347, 0
      %v358 = vsel %vm353, %v348, 0
      %v361 = vsel %vm353, %v345, 0
      %363 = vmatprep.subr.bf16.mxu0 %v358
      %364 = vmatpush1.bf16.msra.mxu0 %v355
      %365 = vmatprep.subr.bf16.mxu0 0
      %366 = vmatpush1.bf16.msra.mxu0 0
      %367 = vmatprep.subr.bf16.mxu0 0
      %368 = vmatpush1.bf16.msra.mxu0 0
      %369 = vmatprep.subr.bf16.mxu0 0
      %370 = vmatpush1.bf16.msra.mxu0 0
      %371 = vmatprep.subr.bf16.mxu0 0
      %372 = vmatpush1.bf16.msra.mxu0 0
      %373 = vmatprep.subr.bf16.mxu0 0
      %374 = vmatpush1.bf16.msra.mxu0 0
      %375 = vmatprep.subr.bf16.mxu0 0
      %376 = vmatpush1.bf16.msra.mxu0 0
      %377 = vmatprep.subr.bf16.mxu0 0
      %378 = vmatpush1.bf16.msra.mxu0 0
      %379 = vmatprep.subr.bf16.mxu0 0
      %380 = vmatpush1.bf16.msra.mxu0 0
      %381 = vmatprep.subr.bf16.mxu0 0
      %382 = vmatpush1.bf16.msra.mxu0 0
      %383 = vmatprep.subr.bf16.mxu0 0
      %384 = vmatpush1.bf16.msra.mxu0 0
      %385 = vmatprep.subr.bf16.mxu0 0
      %386 = vmatpush1.bf16.msra.mxu0 0
      %387 = vmatprep.subr.bf16.mxu0 0
      %388 = vmatpush1.bf16.msra.mxu0 0
      %389 = vmatprep.subr.bf16.mxu0 0
      %390 = vmatpush1.bf16.msra.mxu0 0
      %391 = vmatprep.subr.bf16.mxu0 0
      %392 = vmatpush1.bf16.msra.mxu0 0
      %393 = vmatprep.subr.bf16.mxu0 0
      %394 = vmatpush1.bf16.msra.mxu0 0
      %395 = vmatprep.mubr.bf16.mxu0 0
      %396 = vmatmul.mubr.bf16.gmra.mrb[0].mxu0 %v351
      %v397 = vpop.f32.mrb[0].mxu0
      %v398 = vadd.f32 0.0, %v397
      %v399 = vpop.f32.mrb[0].mxu0
      %v400 = vadd.f32 0.0, %v399
      %v401 = vpop.f32.mrb[0].mxu0
      %v402 = vpop.f32.mrb[0].mxu0
      %403 = vdwg.mxu0
      %404 = vmatprep.subr.bf16.mxu0 0
      %405 = vmatpush1.bf16.msra.mxu0 %v361
      %406 = vmatprep.subr.bf16.mxu0 0
      %407 = vmatpush1.bf16.msra.mxu0 0
      %408 = vmatprep.subr.bf16.mxu0 0
      %409 = vmatpush1.bf16.msra.mxu0 0
      %410 = vmatprep.subr.bf16.mxu0 0
      %411 = vmatpush1.bf16.msra.mxu0 0
      %412 = vmatprep.subr.bf16.mxu0 0
      %413 = vmatpush1.bf16.msra.mxu0 0
      %414 = vmatprep.subr.bf16.mxu0 0
      %415 = vmatpush1.bf16.msra.mxu0 0
      %416 = vmatprep.subr.bf16.mxu0 0
      %417 = vmatpush1.bf16.msra.mxu0 0
      %418 = vmatprep.subr.bf16.mxu0 0
      %419 = vmatpush1.bf16.msra.mxu0 0
      %420 = vmatprep.subr.bf16.mxu0 0
      %421 = vmatpush1.bf16.msra.mxu0 0
      %422 = vmatprep.subr.bf16.mxu0 0
      %423 = vmatpush1.bf16.msra.mxu0 0
      %424 = vmatprep.subr.bf16.mxu0 0
      %425 = vmatpush1.bf16.msra.mxu0 0
      %426 = vmatprep.subr.bf16.mxu0 0
      %427 = vmatpush1.bf16.msra.mxu0 0
      %428 = vmatprep.subr.bf16.mxu0 0
      %429 = vmatpush1.bf16.msra.mxu0 0
      %430 = vmatprep.subr.bf16.mxu0 0
      %431 = vmatpush1.bf16.msra.mxu0 0
      %432 = vmatprep.subr.bf16.mxu0 0
      %433 = vmatpush1.bf16.msra.mxu0 0
      %434 = vmatprep.subr.bf16.mxu0 0
      %435 = vmatpush1.bf16.msra.mxu0 0
      %436 = vmatprep.mubr.bf16.mxu0 0
      %437 = vmatmul.mubr.bf16.gmra.mrb[0].mxu0 %v351
      %v438 = vpop.f32.mrb[0].mxu0
      %v439 = vadd.f32 0.0, %v438
      %v440 = vpop.f32.mrb[0].mxu0
      %v441 = vpop.f32.mrb[0].mxu0
      %v442 = vpop.f32.mrb[0].mxu0
      %443 = vdwg.mxu0
      %v445 = vsel %vm349, %v320, 0
      %v448 = vsel %vm353, %v331, 0
      %v451 = vsel %vm353, %v339, 0
      %v454 = vsel %vm353, %v338, 0
      %456 = vmatprep.subr.bf16.mxu0 %v451
      %457 = vmatpush1.bf16.msra.mxu0 %v448
      %458 = vmatprep.subr.bf16.mxu0 0
      %459 = vmatpush1.bf16.msra.mxu0 0
      %460 = vmatprep.subr.bf16.mxu0 0
      %461 = vmatpush1.bf16.msra.mxu0 0
      %462 = vmatprep.subr.bf16.mxu0 0
      %463 = vmatpush1.bf16.msra.mxu0 0
      %464 = vmatprep.subr.bf16.mxu0 0
      %465 = vmatpush1.bf16.msra.mxu0 0
      %466 = vmatprep.subr.bf16.mxu0 0
      %467 = vmatpush1.bf16.msra.mxu0 0
      %468 = vmatprep.subr.bf16.mxu0 0
      %469 = vmatpush1.bf16.msra.mxu0 0
      %470 = vmatprep.subr.bf16.mxu0 0
      %471 = vmatpush1.bf16.msra.mxu0 0
      %472 = vmatprep.subr.bf16.mxu0 0
      %473 = vmatpush1.bf16.msra.mxu0 0
      %474 = vmatprep.subr.bf16.mxu0 0
      %475 = vmatpush1.bf16.msra.mxu0 0
      %476 = vmatprep.subr.bf16.mxu0 0
      %477 = vmatpush1.bf16.msra.mxu0 0
      %478 = vmatprep.subr.bf16.mxu0 0
      %479 = vmatpush1.bf16.msra.mxu0 0
      %480 = vmatprep.subr.bf16.mxu0 0
      %481 = vmatpush1.bf16.msra.mxu0 0
      %482 = vmatprep.subr.bf16.mxu0 0
      %483 = vmatpush1.bf16.msra.mxu0 0
      %484 = vmatprep.subr.bf16.mxu0 0
      %485 = vmatpush1.bf16.msra.mxu0 0
      %486 = vmatprep.subr.bf16.mxu0 0
      %487 = vmatpush1.bf16.msra.mxu0 0
      %488 = vmatprep.mubr.bf16.mxu0 0
      %489 = vmatmul.mubr.bf16.gmra.mrb[0].mxu0 %v445
      %v490 = vpop.f32.mrb[0].mxu0
      %v491 = vadd.f32 %v398, %v490
      %v492 = vpop.f32.mrb[0].mxu0
      %v493 = vadd.f32 %v400, %v492
      %v494 = vpop.f32.mrb[0].mxu0
      %v495 = vpop.f32.mrb[0].mxu0
      %496 = vdwg.mxu0
      %497 = vmatprep.subr.bf16.mxu0 0
      %498 = vmatpush1.bf16.msra.mxu0 %v454
      %499 = vmatprep.subr.bf16.mxu0 0
      %500 = vmatpush1.bf16.msra.mxu0 0
      %501 = vmatprep.subr.bf16.mxu0 0
      %502 = vmatpush1.bf16.msra.mxu0 0
      %503 = vmatprep.subr.bf16.mxu0 0
      %504 = vmatpush1.bf16.msra.mxu0 0
      %505 = vmatprep.subr.bf16.mxu0 0
      %506 = vmatpush1.bf16.msra.mxu0 0
      %507 = vmatprep.subr.bf16.mxu0 0
      %508 = vmatpush1.bf16.msra.mxu0 0
      %509 = vmatprep.subr.bf16.mxu0 0
      %510 = vmatpush1.bf16.msra.mxu0 0
      %511 = vmatprep.subr.bf16.mxu0 0
      %512 = vmatpush1.bf16.msra.mxu0 0
      %513 = vmatprep.subr.bf16.mxu0 0
      %514 = vmatpush1.bf16.msra.mxu0 0
      %515 = vmatprep.subr.bf16.mxu0 0
      %516 = vmatpush1.bf16.msra.mxu0 0
      %517 = vmatprep.subr.bf16.mxu0 0
      %518 = vmatpush1.bf16.msra.mxu0 0
      %519 = vmatprep.subr.bf16.mxu0 0
      %520 = vmatpush1.bf16.msra.mxu0 0
      %521 = vmatprep.subr.bf16.mxu0 0
      %522 = vmatpush1.bf16.msra.mxu0 0
      %523 = vmatprep.subr.bf16.mxu0 0
      %524 = vmatpush1.bf16.msra.mxu0 0
      %525 = vmatprep.subr.bf16.mxu0 0
      %526 = vmatpush1.bf16.msra.mxu0 0
      %527 = vmatprep.subr.bf16.mxu0 0
      %528 = vmatpush1.bf16.msra.mxu0 0
      %529 = vmatprep.mubr.bf16.mxu0 0
      %530 = vmatmul.mubr.bf16.gmra.mrb[0].mxu0 %v445
      %v531 = vpop.f32.mrb[0].mxu0
      %v532 = vadd.f32 %v439, %v531
      %v533 = vpop.f32.mrb[0].mxu0
      %v534 = vpop.f32.mrb[0].mxu0
      %v535 = vpop.f32.mrb[0].mxu0
      %536 = vdwg.mxu0
      %s537 = scalar_lea.vmem %s294, 8
      %v538 = vld [vmem:[%s537] sm:$0xf]
      %539 = vrot.lane.b32.xlu0 %v331, 126
      %v540 = vpop.permute.xlu0 %539
      %541 = vrot.lane.b32.xlu0 %v339, 126
      %v542 = vpop.permute.xlu0 %541
      %543 = vrot.lane.b32.xlu0 %v338, 126
      %v544 = vpop.permute.xlu0 %543
      %vm545 = vcmask 1031168
      %v546 = vsel %vm545, %v540, %v542
      %v547 = vsel %vm545, %v542, %v544
      %v549 = vsel %vm349, %v538, 0
      %v552 = vsel %vm353, %v546, 0
      %v555 = vsel %vm353, %v547, 0
      %v558 = vsel %vm353, %v544, 0
      %560 = vmatprep.subr.bf16.mxu0 %v555
      %561 = vmatpush1.bf16.msra.mxu0 %v552
      %562 = vmatprep.subr.bf16.mxu0 0
      %563 = vmatpush1.bf16.msra.mxu0 0
      %564 = vmatprep.subr.bf16.mxu0 0
      %565 = vmatpush1.bf16.msra.mxu0 0
      %566 = vmatprep.subr.bf16.mxu0 0
      %567 = vmatpush1.bf16.msra.mxu0 0
      %568 = vmatprep.subr.bf16.mxu0 0
      %569 = vmatpush1.bf16.msra.mxu0 0
      %570 = vmatprep.subr.bf16.mxu0 0
      %571 = vmatpush1.bf16.msra.mxu0 0
      %572 = vmatprep.subr.bf16.mxu0 0
      %573 = vmatpush1.bf16.msra.mxu0 0
      %574 = vmatprep.subr.bf16.mxu0 0
      %575 = vmatpush1.bf16.msra.mxu0 0
      %576 = vmatprep.subr.bf16.mxu0 0
      %577 = vmatpush1.bf16.msra.mxu0 0
      %578 = vmatprep.subr.bf16.mxu0 0
      %579 = vmatpush1.bf16.msra.mxu0 0
      %580 = vmatprep.subr.bf16.mxu0 0
      %581 = vmatpush1.bf16.msra.mxu0 0
      %582 = vmatprep.subr.bf16.mxu0 0
      %583 = vmatpush1.bf16.msra.mxu0 0
      %584 = vmatprep.subr.bf16.mxu0 0
      %585 = vmatpush1.bf16.msra.mxu0 0
      %586 = vmatprep.subr.bf16.mxu0 0
      %587 = vmatpush1.bf16.msra.mxu0 0
      %588 = vmatprep.subr.bf16.mxu0 0
      %589 = vmatpush1.bf16.msra.mxu0 0
      %590 = vmatprep.subr.bf16.mxu0 0
      %591 = vmatpush1.bf16.msra.mxu0 0
      %592 = vmatprep.mubr.bf16.mxu0 0
      %593 = vmatmul.mubr.bf16.gmra.mrb[0].mxu0 %v549
      %v594 = vpop.f32.mrb[0].mxu0
      %v595 = vadd.f32 0.0, %v594
      %v596 = vpop.f32.mrb[0].mxu0
      %v597 = vadd.f32 0.0, %v596
      %v598 = vpop.f32.mrb[0].mxu0
      %v599 = vpop.f32.mrb[0].mxu0
      %600 = vdwg.mxu0
      %601 = vmatprep.subr.bf16.mxu0 0
      %602 = vmatpush1.bf16.msra.mxu0 %v558
      %603 = vmatprep.subr.bf16.mxu0 0
      %604 = vmatpush1.bf16.msra.mxu0 0
      %605 = vmatprep.subr.bf16.mxu0 0
      %606 = vmatpush1.bf16.msra.mxu0 0
      %607 = vmatprep.subr.bf16.mxu0 0
      %608 = vmatpush1.bf16.msra.mxu0 0
      %609 = vmatprep.subr.bf16.mxu0 0
      %610 = vmatpush1.bf16.msra.mxu0 0
      %611 = vmatprep.subr.bf16.mxu0 0
      %612 = vmatpush1.bf16.msra.mxu0 0
      %613 = vmatprep.subr.bf16.mxu0 0
      %614 = vmatpush1.bf16.msra.mxu0 0
      %615 = vmatprep.subr.bf16.mxu0 0
      %616 = vmatpush1.bf16.msra.mxu0 0
      %617 = vmatprep.subr.bf16.mxu0 0
      %618 = vmatpush1.bf16.msra.mxu0 0
      %619 = vmatprep.subr.bf16.mxu0 0
      %620 = vmatpush1.bf16.msra.mxu0 0
      %621 = vmatprep.subr.bf16.mxu0 0
      %622 = vmatpush1.bf16.msra.mxu0 0
      %623 = vmatprep.subr.bf16.mxu0 0
      %624 = vmatpush1.bf16.msra.mxu0 0
      %625 = vmatprep.subr.bf16.mxu0 0
      %626 = vmatpush1.bf16.msra.mxu0 0
      %627 = vmatprep.subr.bf16.mxu0 0
      %628 = vmatpush1.bf16.msra.mxu0 0
      %629 = vmatprep.subr.bf16.mxu0 0
      %630 = vmatpush1.bf16.msra.mxu0 0
      %631 = vmatprep.subr.bf16.mxu0 0
      %632 = vmatpush1.bf16.msra.mxu0 0
      %633 = vmatprep.mubr.bf16.mxu0 0
      %634 = vmatmul.mubr.bf16.gmra.mrb[0].mxu0 %v549
      %v635 = vpop.f32.mrb[0].mxu0
      %v636 = vadd.f32 0.0, %v635
      %v637 = vpop.f32.mrb[0].mxu0
      %v638 = vpop.f32.mrb[0].mxu0
      %v639 = vpop.f32.mrb[0].mxu0
      %640 = vdwg.mxu0
      %v641 = vadd.f32 %v491, %v595
      %v642 = vadd.f32 %v493, %v597
      %v643 = vadd.f32 %v532, %v636
      %s644 = scalar_lea.vmem %s294, 12
      %v645 = vld [vmem:[%s644] sm:$0xf]
      %646 = vrot.lane.b32.xlu0 %v331, 110
      %v647 = vpop.permute.xlu0 %646
      %648 = vrot.lane.b32.xlu0 %v339, 110
      %v649 = vpop.permute.xlu0 %648
      %650 = vrot.lane.b32.xlu0 %v338, 110
      %v651 = vpop.permute.xlu0 %650
      %vm652 = vcmask 900096
      %v653 = vsel %vm652, %v647, %v649
      %v654 = vsel %vm652, %v649, %v651
      %v656 = vsel %vm349, %v645, 0
      %v659 = vsel %vm353, %v653, 0
      %v662 = vsel %vm353, %v654, 0
      %v665 = vsel %vm353, %v651, 0
      %667 = vmatprep.subr.bf16.mxu0 %v662
      %668 = vmatpush1.bf16.msra.mxu0 %v659
      %669 = vmatprep.subr.bf16.mxu0 0
      %670 = vmatpush1.bf16.msra.mxu0 0
      %671 = vmatprep.subr.bf16.mxu0 0
      %672 = vmatpush1.bf16.msra.mxu0 0
      %673 = vmatprep.subr.bf16.mxu0 0
      %674 = vmatpush1.bf16.msra.mxu0 0
      %675 = vmatprep.subr.bf16.mxu0 0
      %676 = vmatpush1.bf16.msra.mxu0 0
      %677 = vmatprep.subr.bf16.mxu0 0
      %678 = vmatpush1.bf16.msra.mxu0 0
      %679 = vmatprep.subr.bf16.mxu0 0
      %680 = vmatpush1.bf16.msra.mxu0 0
      %681 = vmatprep.subr.bf16.mxu0 0
      %682 = vmatpush1.bf16.msra.mxu0 0
      %683 = vmatprep.subr.bf16.mxu0 0
      %684 = vmatpush1.bf16.msra.mxu0 0
      %685 = vmatprep.subr.bf16.mxu0 0
      %686 = vmatpush1.bf16.msra.mxu0 0
      %687 = vmatprep.subr.bf16.mxu0 0
      %688 = vmatpush1.bf16.msra.mxu0 0
      %689 = vmatprep.subr.bf16.mxu0 0
      %690 = vmatpush1.bf16.msra.mxu0 0
      %691 = vmatprep.subr.bf16.mxu0 0
      %692 = vmatpush1.bf16.msra.mxu0 0
      %693 = vmatprep.subr.bf16.mxu0 0
      %694 = vmatpush1.bf16.msra.mxu0 0
      %695 = vmatprep.subr.bf16.mxu0 0
      %696 = vmatpush1.bf16.msra.mxu0 0
      %697 = vmatprep.subr.bf16.mxu0 0
      %698 = vmatpush1.bf16.msra.mxu0 0
      %699 = vmatprep.mubr.bf16.mxu0 0
      %700 = vmatmul.mubr.bf16.gmra.mrb[0].mxu0 %v656
      %v701 = vpop.f32.mrb[0].mxu0
      %v702 = vadd.f32 0.0, %v701
      %v703 = vpop.f32.mrb[0].mxu0
      %v704 = vadd.f32 0.0, %v703
      %v705 = vpop.f32.mrb[0].mxu0
      %v706 = vpop.f32.mrb[0].mxu0
      %707 = vdwg.mxu0
      %708 = vmatprep.subr.bf16.mxu0 0
      %709 = vmatpush1.bf16.msra.mxu0 %v665
      %710 = vmatprep.subr.bf16.mxu0 0
      %711 = vmatpush1.bf16.msra.mxu0 0
      %712 = vmatprep.subr.bf16.mxu0 0
      %713 = vmatpush1.bf16.msra.mxu0 0
      %714 = vmatprep.subr.bf16.mxu0 0
      %715 = vmatpush1.bf16.msra.mxu0 0
      %716 = vmatprep.subr.bf16.mxu0 0
      %717 = vmatpush1.bf16.msra.mxu0 0
      %718 = vmatprep.subr.bf16.mxu0 0
      %719 = vmatpush1.bf16.msra.mxu0 0
      %720 = vmatprep.subr.bf16.mxu0 0
      %721 = vmatpush1.bf16.msra.mxu0 0
      %722 = vmatprep.subr.bf16.mxu0 0
      %723 = vmatpush1.bf16.msra.mxu0 0
      %724 = vmatprep.subr.bf16.mxu0 0
      %725 = vmatpush1.bf16.msra.mxu0 0
      %726 = vmatprep.subr.bf16.mxu0 0
      %727 = vmatpush1.bf16.msra.mxu0 0
      %728 = vmatprep.subr.bf16.mxu0 0
      %729 = vmatpush1.bf16.msra.mxu0 0
      %730 = vmatprep.subr.bf16.mxu0 0
      %731 = vmatpush1.bf16.msra.mxu0 0
      %732 = vmatprep.subr.bf16.mxu0 0
      %733 = vmatpush1.bf16.msra.mxu0 0
      %734 = vmatprep.subr.bf16.mxu0 0
      %735 = vmatpush1.bf16.msra.mxu0 0
      %736 = vmatprep.subr.bf16.mxu0 0
      %737 = vmatpush1.bf16.msra.mxu0 0
      %738 = vmatprep.subr.bf16.mxu0 0
      %739 = vmatpush1.bf16.msra.mxu0 0
      %740 = vmatprep.mubr.bf16.mxu0 0
      %741 = vmatmul.mubr.bf16.gmra.mrb[0].mxu0 %v656
      %v742 = vpop.f32.mrb[0].mxu0
      %v743 = vadd.f32 0.0, %v742
      %v744 = vpop.f32.mrb[0].mxu0
      %v745 = vpop.f32.mrb[0].mxu0
      %v746 = vpop.f32.mrb[0].mxu0
      %747 = vdwg.mxu0
      %v748 = vadd.f32 %v641, %v702
      %v749 = vadd.f32 %v642, %v704
      %v750 = vadd.f32 %v643, %v743
      %s751 = scalar_lea.vmem %s294, 16
      %v752 = vld [vmem:[%s751] sm:$0xf]
      %753 = vrot.lane.b32.xlu0 %v331, 109
      %v754 = vpop.permute.xlu0 %753
      %755 = vrot.lane.b32.xlu0 %v339, 109
      %v756 = vpop.permute.xlu0 %755
      %757 = vrot.lane.b32.xlu0 %v338, 109
      %v758 = vpop.permute.xlu0 %757
      %vm759 = vcmask 891904
      %v760 = vsel %vm759, %v754, %v756
      %v761 = vsel %vm759, %v756, %v758
      %v763 = vsel %vm349, %v752, 0
      %v766 = vsel %vm353, %v760, 0
      %v769 = vsel %vm353, %v761, 0
      %v772 = vsel %vm353, %v758, 0
      %774 = vmatprep.subr.bf16.mxu0 %v769
      %775 = vmatpush1.bf16.msra.mxu0 %v766
      %776 = vmatprep.subr.bf16.mxu0 0
      %777 = vmatpush1.bf16.msra.mxu0 0
      %778 = vmatprep.subr.bf16.mxu0 0
      %779 = vmatpush1.bf16.msra.mxu0 0
      %780 = vmatprep.subr.bf16.mxu0 0
      %781 = vmatpush1.bf16.msra.mxu0 0
      %782 = vmatprep.subr.bf16.mxu0 0
      %783 = vmatpush1.bf16.msra.mxu0 0
      %784 = vmatprep.subr.bf16.mxu0 0
      %785 = vmatpush1.bf16.msra.mxu0 0
      %786 = vmatprep.subr.bf16.mxu0 0
      %787 = vmatpush1.bf16.msra.mxu0 0
      %788 = vmatprep.subr.bf16.mxu0 0
      %789 = vmatpush1.bf16.msra.mxu0 0
      %790 = vmatprep.subr.bf16.mxu0 0
      %791 = vmatpush1.bf16.msra.mxu0 0
      %792 = vmatprep.subr.bf16.mxu0 0
      %793 = vmatpush1.bf16.msra.mxu0 0
      %794 = vmatprep.subr.bf16.mxu0 0
      %795 = vmatpush1.bf16.msra.mxu0 0
      %796 = vmatprep.subr.bf16.mxu0 0
      %797 = vmatpush1.bf16.msra.mxu0 0
      %798 = vmatprep.subr.bf16.mxu0 0
      %799 = vmatpush1.bf16.msra.mxu0 0
      %800 = vmatprep.subr.bf16.mxu0 0
      %801 = vmatpush1.bf16.msra.mxu0 0
      %802 = vmatprep.subr.bf16.mxu0 0
      %803 = vmatpush1.bf16.msra.mxu0 0
      %804 = vmatprep.subr.bf16.mxu0 0
      %805 = vmatpush1.bf16.msra.mxu0 0
      %806 = vmatprep.mubr.bf16.mxu0 0
      %807 = vmatmul.mubr.bf16.gmra.mrb[0].mxu0 %v763
      %v808 = vpop.f32.mrb[0].mxu0
      %v809 = vadd.f32 0.0, %v808
      %v810 = vpop.f32.mrb[0].mxu0
      %v811 = vadd.f32 0.0, %v810
      %v812 = vpop.f32.mrb[0].mxu0
      %v813 = vpop.f32.mrb[0].mxu0
      %814 = vdwg.mxu0
      %815 = vmatprep.subr.bf16.mxu0 0
      %816 = vmatpush1.bf16.msra.mxu0 %v772
      %817 = vmatprep.subr.bf16.mxu0 0
      %818 = vmatpush1.bf16.msra.mxu0 0
      %819 = vmatprep.subr.bf16.mxu0 0
      %820 = vmatpush1.bf16.msra.mxu0 0
      %821 = vmatprep.subr.bf16.mxu0 0
      %822 = vmatpush1.bf16.msra.mxu0 0
      %823 = vmatprep.subr.bf16.mxu0 0
      %824 = vmatpush1.bf16.msra.mxu0 0
      %825 = vmatprep.subr.bf16.mxu0 0
      %826 = vmatpush1.bf16.msra.mxu0 0
      %827 = vmatprep.subr.bf16.mxu0 0
      %828 = vmatpush1.bf16.msra.mxu0 0
      %829 = vmatprep.subr.bf16.mxu0 0
      %830 = vmatpush1.bf16.msra.mxu0 0
      %831 = vmatprep.subr.bf16.mxu0 0
      %832 = vmatpush1.bf16.msra.mxu0 0
      %833 = vmatprep.subr.bf16.mxu0 0
      %834 = vmatpush1.bf16.msra.mxu0 0
      %835 = vmatprep.subr.bf16.mxu0 0
      %836 = vmatpush1.bf16.msra.mxu0 0
      %837 = vmatprep.subr.bf16.mxu0 0
      %838 = vmatpush1.bf16.msra.mxu0 0
      %839 = vmatprep.subr.bf16.mxu0 0
      %840 = vmatpush1.bf16.msra.mxu0 0
      %841 = vmatprep.subr.bf16.mxu0 0
      %842 = vmatpush1.bf16.msra.mxu0 0
      %843 = vmatprep.subr.bf16.mxu0 0
      %844 = vmatpush1.bf16.msra.mxu0 0
      %845 = vmatprep.subr.bf16.mxu0 0
      %846 = vmatpush1.bf16.msra.mxu0 0
      %847 = vmatprep.mubr.bf16.mxu0 0
      %848 = vmatmul.mubr.bf16.gmra.mrb[0].mxu0 %v763
      %v849 = vpop.f32.mrb[0].mxu0
      %v850 = vadd.f32 0.0, %v849
      %v851 = vpop.f32.mrb[0].mxu0
      %v852 = vpop.f32.mrb[0].mxu0
      %v853 = vpop.f32.mrb[0].mxu0
      %854 = vdwg.mxu0
      %v855 = vadd.f32 %v748, %v809
      %v856 = vadd.f32 %v749, %v811
      %v857 = vadd.f32 %v750, %v850
      %s858 = scalar_lea.vmem %s294, 20
      %v859 = vld [vmem:[%s858] sm:$0xf]
      %860 = vrot.lane.b32.xlu0 %v331, 108
      %v861 = vpop.permute.xlu0 %860
      %862 = vrot.lane.b32.xlu0 %v339, 108
      %v863 = vpop.permute.xlu0 %862
      %864 = vrot.lane.b32.xlu0 %v338, 108
      %v865 = vpop.permute.xlu0 %864
      %vm866 = vcmask 883712
      %v867 = vsel %vm866, %v861, %v863
      %v868 = vsel %vm866, %v863, %v865
      %v870 = vsel %vm349, %v859, 0
      %v873 = vsel %vm353, %v867, 0
      %v876 = vsel %vm353, %v868, 0
      %v879 = vsel %vm353, %v865, 0
      %881 = vmatprep.subr.bf16.mxu0 %v876
      %882 = vmatpush1.bf16.msra.mxu0 %v873
      %883 = vmatprep.subr.bf16.mxu0 0
      %884 = vmatpush1.bf16.msra.mxu0 0
      %885 = vmatprep.subr.bf16.mxu0 0
      %886 = vmatpush1.bf16.msra.mxu0 0
      %887 = vmatprep.subr.bf16.mxu0 0
      %888 = vmatpush1.bf16.msra.mxu0 0
      %889 = vmatprep.subr.bf16.mxu0 0
      %890 = vmatpush1.bf16.msra.mxu0 0
      %891 = vmatprep.subr.bf16.mxu0 0
      %892 = vmatpush1.bf16.msra.mxu0 0
      %893 = vmatprep.subr.bf16.mxu0 0
      %894 = vmatpush1.bf16.msra.mxu0 0
      %895 = vmatprep.subr.bf16.mxu0 0
      %896 = vmatpush1.bf16.msra.mxu0 0
      %897 = vmatprep.subr.bf16.mxu0 0
      %898 = vmatpush1.bf16.msra.mxu0 0
      %899 = vmatprep.subr.bf16.mxu0 0
      %900 = vmatpush1.bf16.msra.mxu0 0
      %901 = vmatprep.subr.bf16.mxu0 0
      %902 = vmatpush1.bf16.msra.mxu0 0
      %903 = vmatprep.subr.bf16.mxu0 0
      %904 = vmatpush1.bf16.msra.mxu0 0
      %905 = vmatprep.subr.bf16.mxu0 0
      %906 = vmatpush1.bf16.msra.mxu0 0
      %907 = vmatprep.subr.bf16.mxu0 0
      %908 = vmatpush1.bf16.msra.mxu0 0
      %909 = vmatprep.subr.bf16.mxu0 0
      %910 = vmatpush1.bf16.msra.mxu0 0
      %911 = vmatprep.subr.bf16.mxu0 0
      %912 = vmatpush1.bf16.msra.mxu0 0
      %913 = vmatprep.mubr.bf16.mxu0 0
      %914 = vmatmul.mubr.bf16.gmra.mrb[0].mxu0 %v870
      %v915 = vpop.f32.mrb[0].mxu0
      %v916 = vadd.f32 0.0, %v915
      %v917 = vpop.f32.mrb[0].mxu0
      %v918 = vadd.f32 0.0, %v917
      %v919 = vpop.f32.mrb[0].mxu0
      %v920 = vpop.f32.mrb[0].mxu0
      %921 = vdwg.mxu0
      %922 = vmatprep.subr.bf16.mxu0 0
      %923 = vmatpush1.bf16.msra.mxu0 %v879
      %924 = vmatprep.subr.bf16.mxu0 0
      %925 = vmatpush1.bf16.msra.mxu0 0
      %926 = vmatprep.subr.bf16.mxu0 0
      %927 = vmatpush1.bf16.msra.mxu0 0
      %928 = vmatprep.subr.bf16.mxu0 0
      %929 = vmatpush1.bf16.msra.mxu0 0
      %930 = vmatprep.subr.bf16.mxu0 0
      %931 = vmatpush1.bf16.msra.mxu0 0
      %932 = vmatprep.subr.bf16.mxu0 0
      %933 = vmatpush1.bf16.msra.mxu0 0
      %934 = vmatprep.subr.bf16.mxu0 0
      %935 = vmatpush1.bf16.msra.mxu0 0
      %936 = vmatprep.subr.bf16.mxu0 0
      %937 = vmatpush1.bf16.msra.mxu0 0
      %938 = vmatprep.subr.bf16.mxu0 0
      %939 = vmatpush1.bf16.msra.mxu0 0
      %940 = vmatprep.subr.bf16.mxu0 0
      %941 = vmatpush1.bf16.msra.mxu0 0
      %942 = vmatprep.subr.bf16.mxu0 0
      %943 = vmatpush1.bf16.msra.mxu0 0
      %944 = vmatprep.subr.bf16.mxu0 0
      %945 = vmatpush1.bf16.msra.mxu0 0
      %946 = vmatprep.subr.bf16.mxu0 0
      %947 = vmatpush1.bf16.msra.mxu0 0
      %948 = vmatprep.subr.bf16.mxu0 0
      %949 = vmatpush1.bf16.msra.mxu0 0
      %950 = vmatprep.subr.bf16.mxu0 0
      %951 = vmatpush1.bf16.msra.mxu0 0
      %952 = vmatprep.subr.bf16.mxu0 0
      %953 = vmatpush1.bf16.msra.mxu0 0
      %954 = vmatprep.mubr.bf16.mxu0 0
      %955 = vmatmul.mubr.bf16.gmra.mrb[0].mxu0 %v870
      %v956 = vpop.f32.mrb[0].mxu0
      %v957 = vadd.f32 0.0, %v956
      %v958 = vpop.f32.mrb[0].mxu0
      %v959 = vpop.f32.mrb[0].mxu0
      %v960 = vpop.f32.mrb[0].mxu0
      %961 = vdwg.mxu0
      %v962 = vadd.f32 %v855, %v916
      %v963 = vadd.f32 %v856, %v918
      %v964 = vadd.f32 %v857, %v957
      %s965 = scalar_lea.vmem %s294, 24
      %v966 = vld [vmem:[%s965] sm:$0xf]
      %967 = vrot.lane.b32.xlu0 %v331, 92
      %v968 = vpop.permute.xlu0 %967
      %969 = vrot.lane.b32.xlu0 %v339, 92
      %v970 = vpop.permute.xlu0 %969
      %971 = vrot.lane.b32.xlu0 %v338, 92
      %v972 = vpop.permute.xlu0 %971
      %vm973 = vcmask 752640
      %v974 = vsel %vm973, %v968, %v970
      %v975 = vsel %vm973, %v970, %v972
      %v977 = vsel %vm349, %v966, 0
      %v980 = vsel %vm353, %v974, 0
      %v983 = vsel %vm353, %v975, 0
      %v986 = vsel %vm353, %v972, 0
      %988 = vmatprep.subr.bf16.mxu0 %v983
      %989 = vmatpush1.bf16.msra.mxu0 %v980
      %990 = vmatprep.subr.bf16.mxu0 0
      %991 = vmatpush1.bf16.msra.mxu0 0
      %992 = vmatprep.subr.bf16.mxu0 0
      %993 = vmatpush1.bf16.msra.mxu0 0
      %994 = vmatprep.subr.bf16.mxu0 0
      %995 = vmatpush1.bf16.msra.mxu0 0
      %996 = vmatprep.subr.bf16.mxu0 0
      %997 = vmatpush1.bf16.msra.mxu0 0
      %998 = vmatprep.subr.bf16.mxu0 0
      %999 = vmatpush1.bf16.msra.mxu0 0
      %1000 = vmatprep.subr.bf16.mxu0 0
      %1001 = vmatpush1.bf16.msra.mxu0 0
      %1002 = vmatprep.subr.bf16.mxu0 0
      %1003 = vmatpush1.bf16.msra.mxu0 0
      %1004 = vmatprep.subr.bf16.mxu0 0
      %1005 = vmatpush1.bf16.msra.mxu0 0
      %1006 = vmatprep.subr.bf16.mxu0 0
      %1007 = vmatpush1.bf16.msra.mxu0 0
      %1008 = vmatprep.subr.bf16.mxu0 0
      %1009 = vmatpush1.bf16.msra.mxu0 0
      %1010 = vmatprep.subr.bf16.mxu0 0
      %1011 = vmatpush1.bf16.msra.mxu0 0
      %1012 = vmatprep.subr.bf16.mxu0 0
      %1013 = vmatpush1.bf16.msra.mxu0 0
      %1014 = vmatprep.subr.bf16.mxu0 0
      %1015 = vmatpush1.bf16.msra.mxu0 0
      %1016 = vmatprep.subr.bf16.mxu0 0
      %1017 = vmatpush1.bf16.msra.mxu0 0
      %1018 = vmatprep.subr.bf16.mxu0 0
      %1019 = vmatpush1.bf16.msra.mxu0 0
      %1020 = vmatprep.mubr.bf16.mxu0 0
      %1021 = vmatmul.mubr.bf16.gmra.mrb[0].mxu0 %v977
      %v1022 = vpop.f32.mrb[0].mxu0
      %v1023 = vadd.f32 0.0, %v1022
      %v1024 = vpop.f32.mrb[0].mxu0
      %v1025 = vadd.f32 0.0, %v1024
      %v1026 = vpop.f32.mrb[0].mxu0
      %v1027 = vpop.f32.mrb[0].mxu0
      %1028 = vdwg.mxu0
      %1029 = vmatprep.subr.bf16.mxu0 0
      %1030 = vmatpush1.bf16.msra.mxu0 %v986
      %1031 = vmatprep.subr.bf16.mxu0 0
      %1032 = vmatpush1.bf16.msra.mxu0 0
      %1033 = vmatprep.subr.bf16.mxu0 0
      %1034 = vmatpush1.bf16.msra.mxu0 0
      %1035 = vmatprep.subr.bf16.mxu0 0
      %1036 = vmatpush1.bf16.msra.mxu0 0
      %1037 = vmatprep.subr.bf16.mxu0 0
      %1038 = vmatpush1.bf16.msra.mxu0 0
      %1039 = vmatprep.subr.bf16.mxu0 0
      %1040 = vmatpush1.bf16.msra.mxu0 0
      %1041 = vmatprep.subr.bf16.mxu0 0
      %1042 = vmatpush1.bf16.msra.mxu0 0
      %1043 = vmatprep.subr.bf16.mxu0 0
      %1044 = vmatpush1.bf16.msra.mxu0 0
      %1045 = vmatprep.subr.bf16.mxu0 0
      %1046 = vmatpush1.bf16.msra.mxu0 0
      %1047 = vmatprep.subr.bf16.mxu0 0
      %1048 = vmatpush1.bf16.msra.mxu0 0
      %1049 = vmatprep.subr.bf16.mxu0 0
      %1050 = vmatpush1.bf16.msra.mxu0 0
      %1051 = vmatprep.subr.bf16.mxu0 0
      %1052 = vmatpush1.bf16.msra.mxu0 0
      %1053 = vmatprep.subr.bf16.mxu0 0
      %1054 = vmatpush1.bf16.msra.mxu0 0
      %1055 = vmatprep.subr.bf16.mxu0 0
      %1056 = vmatpush1.bf16.msra.mxu0 0
      %1057 = vmatprep.subr.bf16.mxu0 0
      %1058 = vmatpush1.bf16.msra.mxu0 0
      %1059 = vmatprep.subr.bf16.mxu0 0
      %1060 = vmatpush1.bf16.msra.mxu0 0
      %1061 = vmatprep.mubr.bf16.mxu0 0
      %1062 = vmatmul.mubr.bf16.gmra.mrb[0].mxu0 %v977
      %v1063 = vpop.f32.mrb[0].mxu0
      %v1064 = vadd.f32 0.0, %v1063
      %v1065 = vpop.f32.mrb[0].mxu0
      %v1066 = vpop.f32.mrb[0].mxu0
      %v1067 = vpop.f32.mrb[0].mxu0
      %1068 = vdwg.mxu0
      %v1069 = vadd.f32 %v962, %v1023
      %v1070 = vadd.f32 %v963, %v1025
      %v1071 = vadd.f32 %v964, %v1064
      %s1072 = scalar_lea.vmem %s294, 28
      %v1073 = vld [vmem:[%s1072] sm:$0xf]
      %1074 = vrot.lane.b32.xlu0 %v331, 91
      %v1075 = vpop.permute.xlu0 %1074
      %1076 = vrot.lane.b32.xlu0 %v339, 91
      %v1077 = vpop.permute.xlu0 %1076
      %1078 = vrot.lane.b32.xlu0 %v338, 91
      %v1079 = vpop.permute.xlu0 %1078
      %vm1080 = vcmask 744448
      %v1081 = vsel %vm1080, %v1075, %v1077
      %v1082 = vsel %vm1080, %v1077, %v1079
      %v1084 = vsel %vm349, %v1073, 0
      %v1087 = vsel %vm353, %v1081, 0
      %v1090 = vsel %vm353, %v1082, 0
      %v1093 = vsel %vm353, %v1079, 0
      %1095 = vmatprep.subr.bf16.mxu0 %v1090
      %1096 = vmatpush1.bf16.msra.mxu0 %v1087
      %1097 = vmatprep.subr.bf16.mxu0 0
      %1098 = vmatpush1.bf16.msra.mxu0 0
      %1099 = vmatprep.subr.bf16.mxu0 0
      %1100 = vmatpush1.bf16.msra.mxu0 0
      %1101 = vmatprep.subr.bf16.mxu0 0
      %1102 = vmatpush1.bf16.msra.mxu0 0
      %1103 = vmatprep.subr.bf16.mxu0 0
      %1104 = vmatpush1.bf16.msra.mxu0 0
      %1105 = vmatprep.subr.bf16.mxu0 0
      %1106 = vmatpush1.bf16.msra.mxu0 0
      %1107 = vmatprep.subr.bf16.mxu0 0
      %1108 = vmatpush1.bf16.msra.mxu0 0
      %1109 = vmatprep.subr.bf16.mxu0 0
      %1110 = vmatpush1.bf16.msra.mxu0 0
      %1111 = vmatprep.subr.bf16.mxu0 0
      %1112 = vmatpush1.bf16.msra.mxu0 0
      %1113 = vmatprep.subr.bf16.mxu0 0
      %1114 = vmatpush1.bf16.msra.mxu0 0
      %1115 = vmatprep.subr.bf16.mxu0 0
      %1116 = vmatpush1.bf16.msra.mxu0 0
      %1117 = vmatprep.subr.bf16.mxu0 0
      %1118 = vmatpush1.bf16.msra.mxu0 0
      %1119 = vmatprep.subr.bf16.mxu0 0
      %1120 = vmatpush1.bf16.msra.mxu0 0
      %1121 = vmatprep.subr.bf16.mxu0 0
      %1122 = vmatpush1.bf16.msra.mxu0 0
      %1123 = vmatprep.subr.bf16.mxu0 0
      %1124 = vmatpush1.bf16.msra.mxu0 0
      %1125 = vmatprep.subr.bf16.mxu0 0
      %1126 = vmatpush1.bf16.msra.mxu0 0
      %1127 = vmatprep.mubr.bf16.mxu0 0
      %1128 = vmatmul.mubr.bf16.gmra.mrb[0].mxu0 %v1084
      %v1129 = vpop.f32.mrb[0].mxu0
      %v1130 = vadd.f32 0.0, %v1129
      %v1131 = vpop.f32.mrb[0].mxu0
      %v1132 = vadd.f32 0.0, %v1131
      %v1133 = vpop.f32.mrb[0].mxu0
      %v1134 = vpop.f32.mrb[0].mxu0
      %1135 = vdwg.mxu0
      %1136 = vmatprep.subr.bf16.mxu0 0
      %1137 = vmatpush1.bf16.msra.mxu0 %v1093
      %1138 = vmatprep.subr.bf16.mxu0 0
      %1139 = vmatpush1.bf16.msra.mxu0 0
      %1140 = vmatprep.subr.bf16.mxu0 0
      %1141 = vmatpush1.bf16.msra.mxu0 0
      %1142 = vmatprep.subr.bf16.mxu0 0
      %1143 = vmatpush1.bf16.msra.mxu0 0
      %1144 = vmatprep.subr.bf16.mxu0 0
      %1145 = vmatpush1.bf16.msra.mxu0 0
      %1146 = vmatprep.subr.bf16.mxu0 0
      %1147 = vmatpush1.bf16.msra.mxu0 0
      %1148 = vmatprep.subr.bf16.mxu0 0
      %1149 = vmatpush1.bf16.msra.mxu0 0
      %1150 = vmatprep.subr.bf16.mxu0 0
      %1151 = vmatpush1.bf16.msra.mxu0 0
      %1152 = vmatprep.subr.bf16.mxu0 0
      %1153 = vmatpush1.bf16.msra.mxu0 0
      %1154 = vmatprep.subr.bf16.mxu0 0
      %1155 = vmatpush1.bf16.msra.mxu0 0
      %1156 = vmatprep.subr.bf16.mxu0 0
      %1157 = vmatpush1.bf16.msra.mxu0 0
      %1158 = vmatprep.subr.bf16.mxu0 0
      %1159 = vmatpush1.bf16.msra.mxu0 0
      %1160 = vmatprep.subr.bf16.mxu0 0
      %1161 = vmatpush1.bf16.msra.mxu0 0
      %1162 = vmatprep.subr.bf16.mxu0 0
      %1163 = vmatpush1.bf16.msra.mxu0 0
      %1164 = vmatprep.subr.bf16.mxu0 0
      %1165 = vmatpush1.bf16.msra.mxu0 0
      %1166 = vmatprep.subr.bf16.mxu0 0
      %1167 = vmatpush1.bf16.msra.mxu0 0
      %1168 = vmatprep.mubr.bf16.mxu0 0
      %1169 = vmatmul.mubr.bf16.gmra.mrb[0].mxu0 %v1084
      %v1170 = vpop.f32.mrb[0].mxu0
      %v1171 = vadd.f32 0.0, %v1170
      %v1172 = vpop.f32.mrb[0].mxu0
      %v1173 = vpop.f32.mrb[0].mxu0
      %v1174 = vpop.f32.mrb[0].mxu0
      %1175 = vdwg.mxu0
      %v1176 = vadd.f32 %v1069, %v1130
      %v1177 = vadd.f32 %v1070, %v1132
      %v1178 = vadd.f32 %v1071, %v1171
      %s1179 = scalar_lea.vmem %s294, 32
      %v1180 = vld [vmem:[%s1179] sm:$0xf]
      %1181 = vrot.lane.b32.xlu0 %v331, 90
      %v1182 = vpop.permute.xlu0 %1181
      %1183 = vrot.lane.b32.xlu0 %v339, 90
      %v1184 = vpop.permute.xlu0 %1183
      %1185 = vrot.lane.b32.xlu0 %v338, 90
      %v1186 = vpop.permute.xlu0 %1185
      %vm1187 = vcmask 736256
      %v1188 = vsel %vm1187, %v1182, %v1184
      %v1189 = vsel %vm1187, %v1184, %v1186
      %v1191 = vsel %vm349, %v1180, 0
      %v1194 = vsel %vm353, %v1188, 0
      %v1197 = vsel %vm353, %v1189, 0
      %v1200 = vsel %vm353, %v1186, 0
      %1202 = vmatprep.subr.bf16.mxu0 %v1197
      %1203 = vmatpush1.bf16.msra.mxu0 %v1194
      %1204 = vmatprep.subr.bf16.mxu0 0
      %1205 = vmatpush1.bf16.msra.mxu0 0
      %1206 = vmatprep.subr.bf16.mxu0 0
      %1207 = vmatpush1.bf16.msra.mxu0 0
      %1208 = vmatprep.subr.bf16.mxu0 0
      %1209 = vmatpush1.bf16.msra.mxu0 0
      %1210 = vmatprep.subr.bf16.mxu0 0
      %1211 = vmatpush1.bf16.msra.mxu0 0
      %1212 = vmatprep.subr.bf16.mxu0 0
      %1213 = vmatpush1.bf16.msra.mxu0 0
      %1214 = vmatprep.subr.bf16.mxu0 0
      %1215 = vmatpush1.bf16.msra.mxu0 0
      %1216 = vmatprep.subr.bf16.mxu0 0
      %1217 = vmatpush1.bf16.msra.mxu0 0
      %1218 = vmatprep.subr.bf16.mxu0 0
      %1219 = vmatpush1.bf16.msra.mxu0 0
      %1220 = vmatprep.subr.bf16.mxu0 0
      %1221 = vmatpush1.bf16.msra.mxu0 0
      %1222 = vmatprep.subr.bf16.mxu0 0
      %1223 = vmatpush1.bf16.msra.mxu0 0
      %1224 = vmatprep.subr.bf16.mxu0 0
      %1225 = vmatpush1.bf16.msra.mxu0 0
      %1226 = vmatprep.subr.bf16.mxu0 0
      %1227 = vmatpush1.bf16.msra.mxu0 0
      %1228 = vmatprep.subr.bf16.mxu0 0
      %1229 = vmatpush1.bf16.msra.mxu0 0
      %1230 = vmatprep.subr.bf16.mxu0 0
      %1231 = vmatpush1.bf16.msra.mxu0 0
      %1232 = vmatprep.subr.bf16.mxu0 0
      %1233 = vmatpush1.bf16.msra.mxu0 0
      %1234 = vmatprep.mubr.bf16.mxu0 0
      %1235 = vmatmul.mubr.bf16.gmra.mrb[0].mxu0 %v1191
      %v1236 = vpop.f32.mrb[0].mxu0
      %v1237 = vadd.f32 0.0, %v1236
      %v1238 = vpop.f32.mrb[0].mxu0
      %v1239 = vadd.f32 0.0, %v1238
      %v1240 = vpop.f32.mrb[0].mxu0
      %v1241 = vpop.f32.mrb[0].mxu0
      %1242 = vdwg.mxu0
      %1243 = vmatprep.subr.bf16.mxu0 0
      %1244 = vmatpush1.bf16.msra.mxu0 %v1200
      %1245 = vmatprep.subr.bf16.mxu0 0
      %1246 = vmatpush1.bf16.msra.mxu0 0
      %1247 = vmatprep.subr.bf16.mxu0 0
      %1248 = vmatpush1.bf16.msra.mxu0 0
      %1249 = vmatprep.subr.bf16.mxu0 0
      %1250 = vmatpush1.bf16.msra.mxu0 0
      %1251 = vmatprep.subr.bf16.mxu0 0
      %1252 = vmatpush1.bf16.msra.mxu0 0
      %1253 = vmatprep.subr.bf16.mxu0 0
      %1254 = vmatpush1.bf16.msra.mxu0 0
      %1255 = vmatprep.subr.bf16.mxu0 0
      %1256 = vmatpush1.bf16.msra.mxu0 0
      %1257 = vmatprep.subr.bf16.mxu0 0
      %1258 = vmatpush1.bf16.msra.mxu0 0
      %1259 = vmatprep.subr.bf16.mxu0 0
      %1260 = vmatpush1.bf16.msra.mxu0 0
      %1261 = vmatprep.subr.bf16.mxu0 0
      %1262 = vmatpush1.bf16.msra.mxu0 0
      %1263 = vmatprep.subr.bf16.mxu0 0
      %1264 = vmatpush1.bf16.msra.mxu0 0
      %1265 = vmatprep.subr.bf16.mxu0 0
      %1266 = vmatpush1.bf16.msra.mxu0 0
      %1267 = vmatprep.subr.bf16.mxu0 0
      %1268 = vmatpush1.bf16.msra.mxu0 0
      %1269 = vmatprep.subr.bf16.mxu0 0
      %1270 = vmatpush1.bf16.msra.mxu0 0
      %1271 = vmatprep.subr.bf16.mxu0 0
      %1272 = vmatpush1.bf16.msra.mxu0 0
      %1273 = vmatprep.subr.bf16.mxu0 0
      %1274 = vmatpush1.bf16.msra.mxu0 0
      %1275 = vmatprep.mubr.bf16.mxu0 0
      %1276 = vmatmul.mubr.bf16.gmra.mrb[0].mxu0 %v1191
      %v1277 = vpop.f32.mrb[0].mxu0
      %v1278 = vadd.f32 0.0, %v1277
      %v1279 = vpop.f32.mrb[0].mxu0
      %v1280 = vpop.f32.mrb[0].mxu0
      %v1281 = vpop.f32.mrb[0].mxu0
      %1282 = vdwg.mxu0
      %v1283 = vadd.f32 %v1176, %v1237
      %v1284 = vadd.f32 %v1177, %v1239
      %v1285 = vadd.f32 %v1178, %v1278
      %v1286 = vpack.c.bf16 %v1283, %v1283
      %v1287 = vpack.c.bf16 %v1284, %v1284
      %v1288 = vpack.c.bf16 %v1285, %v1285
      %v1292 = vunpack.c.l.b16 %v1286
      %v1293 = vunpack.c.l.b16 %v1287
      %v1294 = vunpack.c.l.b16 %v1288
      %v1295 = vpack.c.b16 %v1293, %v1292
      %v1296 = vpack.c.b16 %v1294, %v1294
      %1299 = vst [vmem:[%s303] sm:$0xff] %v1295
      %vm1300 = vcmask 257024
      %1301 = vst.msk [vmem:[%s303 + $0x8] sm:$0xf] %vm1300, %v1296
      %v1302 = vld [vmem:[%s0] sm:$0x7]
      %v1304 = vlaneseq
      %v1305 = vshrl.u32 %v1304, 7
      %v1306 = vsub.s32 0, %v1305
      %v1307 = vrot.slane %v1302, %v1306
      %v1308 = vlaneseq
      %v1309 = vshrl.u32 %v1308, 7
      %v1310 = vsub.s32 1, %v1309
      %v1311 = vrot.slane %v1302, %v1310
      %v1312 = vlaneseq
      %v1313 = vshrl.u32 %v1312, 7
      %v1314 = vsub.s32 2, %v1313
      %v1315 = vrot.slane %v1302, %v1314
      %v1319 = vmul.f32 %v1283, %v1307
      %v1320 = vmul.f32 %v1284, %v1311
      %v1321 = vmul.f32 %v1285, %v1315
      %v1322 = vadd.f32 %v1319, %v1320
      %vm1323 = vcmask 261120
      %v1324 = vsel %vm1323, %v1321, 0.0
      %v1325 = vadd.f32 %v1322, %v1324
      %1326 = vadd.xlane.f32.xlu0 %v1325
      %v1327 = vpop.xlane.xlu0 %1326
      %vm1328 = vcmask 7168
      %1329 = vst.msk [vmem:[%s310] sm:$0xff] %vm1328, %v1327
      %v1330 = vmul.f32 %v1319, %v1283
      %v1331 = vmul.f32 %v1320, %v1284
      %v1332 = vmul.f32 %v1321, %v1285
      %v1333 = vadd.f32 %v1330, %v1331
      %v1334 = vsel %vm1323, %v1332, 0.0
      %v1335 = vadd.f32 %v1333, %v1334
      %1336 = vadd.xlane.f32.xlu0 %v1335
      %v1337 = vpop.xlane.xlu0 %1336
      %1338 = vst.msk [vmem:[%s317] sm:$0xff] %vm1328, %v1337
      %p1339 = scmp.lt.s32.totalorder %s22, 1
      %s1340 = scalar_select %p1339, %s22, 1
      %p1341 = scmp.lt.s32.totalorder %s21, 0
      %s1342 = scalar_select %p1341, %s21, 0
      %s1343 = smul.addr %s1342, 3
      %s1344 = smul.addr %s1340, 3
      %s1345 = sadd.s32 %s1343, %s1344
      %s1346 = smul.addr %s1345, 4
      %s1347 = scalar_lea.vmem %s3, %s1346
      %p1348 = scmp.lt.s32.totalorder %s22, 1
      %s1349 = scalar_select %p1348, %s22, 1
      %p1350 = scmp.lt.s32.totalorder %s21, 0
      %s1351 = scalar_select %p1350, %s21, 0
      %s1352 = sadd.s32 %s1351, %s1349
      %s1353 = smul.addr %s1352, 8
      %s1354 = scalar_lea.vmem %s4, %s1353
      %p1355 = scmp.lt.s32.totalorder %s22, 1
      %s1356 = scalar_select %p1355, %s22, 1
      %p1357 = scmp.lt.s32.totalorder %s21, 0
      %s1358 = scalar_select %p1357, %s21, 0
      %s1359 = sadd.s32 %s1358, %s1356
      %s1360 = smul.addr %s1359, 8
      %s1361 = scalar_lea.vmem %s5, %s1360
      // Predicated region
      $region33: #{bn_conv2d_forward.2} parent=31 // pred_check
        %p1362 = pneg %p124
      $region34: #{bn_conv2d_forward.2} parent=31 // pred_check_branch
        %1364 = sbr.rel (%p1362) target = $region36
      $region35: #{bn_conv2d_forward.2} parent=31 // pred_region
        _
      $region36: #{bn_conv2d_forward.2} parent=31 // pred_fallthru
        _
      // Predicated region
      $region37: #{bn_conv2d_forward.2} parent=31 // pred_check
        %p1365 = pneg %p152
      $region38: #{bn_conv2d_forward.2} parent=31 // pred_check_branch
        %1367 = sbr.rel (%p1365) target = $region40
      $region39: #{bn_conv2d_forward.2} parent=31 // pred_region
        _
      $region40: #{bn_conv2d_forward.2} parent=31 // pred_fallthru
        _
      // Predicated region
      $region41: #{bn_conv2d_forward.2} parent=31 // pred_check
        %p1368 = pneg %p180
      $region42: #{bn_conv2d_forward.2} parent=31 // pred_check_branch
        %1370 = sbr.rel (%p1368) target = $region44
      $region43: #{bn_conv2d_forward.2} parent=31 // pred_region
        _
      $region44: #{bn_conv2d_forward.2} parent=31 // pred_fallthru
        _
    $region32: #{bn_conv2d_forward.2} parent=5 // pred_fallthru
      _
    %p1371 = scmp.le.s32.totalorder 2, %s12
    // Predicated region
    $region45: #{bn_conv2d_forward.2} parent=5 // pred_check
      %p1372 = pneg %p1371
    $region46: #{bn_conv2d_forward.2} parent=5 // pred_check_branch
      %1374 = sbr.rel (%p1372) target = $region48
    $region47: #{bn_conv2d_forward.2} parent=5 // pred_region
      %s1375 = ssub.s32 %s12, 2
      // Predicated region
      $region49: #{bn_conv2d_forward.2} parent=47 // pred_check
        %p1376 = pneg %p130
      $region50: #{bn_conv2d_forward.2} parent=47 // pred_check_branch
        %1378 = sbr.rel (%p1376) target = $region52
      $region51: #{bn_conv2d_forward.2} parent=47 // pred_region
        %p1379 = scmp.lt.s32.totalorder %s24, 1
        %s1380 = scalar_select %p1379, %s24, 1
        %p1381 = scmp.lt.s32.totalorder %s23, 0
        %s1382 = scalar_select %p1381, %s23, 0
        %s1383 = smul.addr %s1382, 3
        %s1384 = smul.addr %s1380, 3
        %s1385 = sadd.s32 %s1383, %s1384
        %s1386 = smul.addr %s1385, 4
        %s1387 = scalar_lea.vmem %s3, %s1386
      $region52: #{bn_conv2d_forward.2} parent=47 // pred_fallthru
        _
      // Predicated region
      $region53: #{bn_conv2d_forward.2} parent=47 // pred_check
        %p1388 = pneg %p158
      $region54: #{bn_conv2d_forward.2} parent=47 // pred_check_branch
        %1390 = sbr.rel (%p1388) target = $region56
      $region55: #{bn_conv2d_forward.2} parent=47 // pred_region
        %p1391 = scmp.lt.s32.totalorder %s24, 1
        %s1392 = scalar_select %p1391, %s24, 1
        %p1393 = scmp.lt.s32.totalorder %s23, 0
        %s1394 = scalar_select %p1393, %s23, 0
        %s1395 = sadd.s32 %s1394, %s1392
        %s1396 = smul.addr %s1395, 8
        %s1397 = scalar_lea.vmem %s4, %s1396
      $region56: #{bn_conv2d_forward.2} parent=47 // pred_fallthru
        _
      // Predicated region
      $region57: #{bn_conv2d_forward.2} parent=47 // pred_check
        %p1398 = pneg %p186
      $region58: #{bn_conv2d_forward.2} parent=47 // pred_check_branch
        %1400 = sbr.rel (%p1398) target = $region60
      $region59: #{bn_conv2d_forward.2} parent=47 // pred_region
        %p1401 = scmp.lt.s32.totalorder %s24, 1
        %s1402 = scalar_select %p1401, %s24, 1
        %p1403 = scmp.lt.s32.totalorder %s23, 0
        %s1404 = scalar_select %p1403, %s23, 0
        %s1405 = sadd.s32 %s1404, %s1402
        %s1406 = smul.addr %s1405, 8
        %s1407 = scalar_lea.vmem %s5, %s1406
      $region60: #{bn_conv2d_forward.2} parent=47 // pred_fallthru
        _
    $region48: #{bn_conv2d_forward.2} parent=5 // pred_fallthru
      _
  $region6: #{bn_conv2d_forward.2} parent=0 // loop_footer
    %s16 = sadd.s32 1, %s12
  $region7: #{bn_conv2d_forward.2} parent=0 // loop_footer_branch
    %11 = sbr.rel target = $region3
  $region8: #{bn_conv2d_forward.2} parent=0 // loop_exit
    _

</llo_original>
